<compile_context>
chip_gen: v6e
topology: v6e:2x2x1
jax: 0.10.0
libtpu: 0.0.40
codegen_flags: <defaults>
</compile_context>

<pallas_src>
import functools

import jax
import jax.numpy as jnp
from jax.experimental import pallas as pl
from jax.experimental.pallas import tpu as pltpu

KSIZE = 3          # conv kernel size (3x3, padding 'same')
BN_EPS = 1e-5      # PyTorch BatchNorm2d default eps


def _double_conv_kernel(x_ref, m_ref, w1_ref, g1_ref, be1_ref,
                        w2_ref, g2_ref, be2_ref, o_ref,
                        rhs1_ref, rhs2_ref, *, H, W, matmul_dtype):
    # x_ref : VMEM (Cin, N)    with N = B*H*W (lane-dense slab)
    # m_ref : VMEM (9, N)      precomputed 0/1 border masks, tap = ky*3+kx
    # wK_ref: VMEM (Cout, 9*CinK)  fused tap-major weight matrix
    # gK/beK: VMEM (Cout, 1)       BN gamma / beta
    # o_ref : VMEM (Cout, N)
    # rhsK_ref: VMEM scratch (9*CinK, N) for the stacked matmul RHS
    N = x_ref.shape[1]

    def conv_bn_relu(a, w_ref, g_ref, be_ref, rhs_ref):
        c = a.shape[0]
        # Build the stacked masked/rolled RHS, tap-major: rows [t*c:(t+1)*c]
        # hold the input shifted by (oy, ox) = (ky-1, kx-1), zeroed where the
        # tap falls outside the image (also kills cross-batch/row wrap-around).
        for ky in range(KSIZE):
            for kx in range(KSIZE):
                t = ky * KSIZE + kx
                off = (ky - 1) * W + (kx - 1)
                shift = (-off) % N                       # shifted[j] = a[j + off]
                shifted = pltpu.roll(a, shift, axis=1) if shift else a
                rhs_ref[t * c:(t + 1) * c, :] = shifted * m_ref[t:t + 1, :]

        # Single fused MXU matmul per layer: (Cout, 9*Cin) x (9*Cin, N).
        acc = jnp.dot(w_ref[...].astype(matmul_dtype),
                      rhs_ref[...].astype(matmul_dtype),
                      preferred_element_type=jnp.float32)      # (Cout, N) f32

        # BatchNorm2d training-mode forward (biased variance over B*H*W = lane
        # axis), single-pass statistics, gamma folded into the scale; then ReLU.
        mean = jnp.mean(acc, axis=1, keepdims=True)
        mean_sq = jnp.mean(acc * acc, axis=1, keepdims=True)
        var = mean_sq - mean * mean
        scale = g_ref[...] * jax.lax.rsqrt(var + BN_EPS)
        shift_ = be_ref[...] - mean * scale
        return jnp.maximum(acc * scale + shift_, 0.0)

    a1 = conv_bn_relu(x_ref[...].astype(jnp.float32),
                      w1_ref, g1_ref, be1_ref, rhs1_ref)
    a2 = conv_bn_relu(a1, w2_ref, g2_ref, be2_ref, rhs2_ref)
    o_ref[...] = a2.astype(o_ref.dtype)


def _fused_weight(w):
    # (O, I, 3, 3) -> (O, 9*I), column index = (ky*3+kx)*I + ci (tap-major,
    # matching the stacked RHS row order).
    o, i = w.shape[0], w.shape[1]
    return jnp.transpose(w, (0, 2, 3, 1)).reshape(o, KSIZE * KSIZE * i).astype(jnp.float32)


def _border_masks(H, W, N):
    # (9, N) f32; tap t = ky*3+kx is 1 where input (row+ky-1, col+kx-1) lies
    # inside the image, per flat index n within each (H, W) image.
    flat = jnp.arange(N, dtype=jnp.int32)
    col = flat % W
    row = (flat // W) % H
    rows = []
    for ky in range(KSIZE):
        for kx in range(KSIZE):
            oy, ox = ky - 1, kx - 1
            rows.append((row + oy >= 0) & (row + oy < H) &
                        (col + ox >= 0) & (col + ox < W))
    return jnp.stack(rows).astype(jnp.float32)


def double_2d_conv_slab(x_slab, params, H, W, *, matmul_dtype=jnp.float32):
    """Lane-dense entry point: x_slab (Cin, N=B*H*W) -> (Cout, N).

    Use this directly when chaining Double2DConv blocks to avoid the
    NCHW <-> slab transposes (an extra HBM round trip per boundary).
    """
    cin, N = x_slab.shape
    cout = params["w1"].shape[0]
    per_ch = lambda v: v.reshape(-1, 1).astype(jnp.float32)
    vmem = pl.BlockSpec(memory_space=pltpu.MemorySpace.VMEM)

    return pl.pallas_call(
        functools.partial(_double_conv_kernel, H=H, W=W, matmul_dtype=matmul_dtype),
        out_shape=jax.ShapeDtypeStruct((cout, N), jnp.float32),
        in_specs=[vmem] * 8,
        out_specs=vmem,
        scratch_shapes=[pltpu.VMEM((KSIZE * KSIZE * cin, N), jnp.float32),
                        pltpu.VMEM((KSIZE * KSIZE * cout, N), jnp.float32)],
        compiler_params=pltpu.CompilerParams(vmem_limit_bytes=32 * 1024 * 1024),
    )(x_slab, _border_masks(H, W, N),
      _fused_weight(params["w1"]), per_ch(params["g1"]), per_ch(params["be1"]),
      _fused_weight(params["w2"]), per_ch(params["g2"]), per_ch(params["be2"]))


def double_2d_conv(x, params, *, matmul_dtype=jnp.float32):
    """NCHW boundary wrapper: x (B, Cin, H, W) -> (B, Cout, H, W)."""
    B, cin, H, W = x.shape
    cout = params["w1"].shape[0]
    N = B * H * W
    # Perf note: lane-dense stores assume N % 128 == 0 (true here: 512);
    # correctness holds for any N (masked partial stores otherwise).
    x_slab = jnp.transpose(x, (1, 0, 2, 3)).reshape(cin, N)
    out = double_2d_conv_slab(x_slab, params, H, W, matmul_dtype=matmul_dtype)
    return jnp.transpose(out.reshape(cout, B, H, W), (1, 0, 2, 3))


def _reference(x, params):
    """Pure-JAX reference matching PyTorch Double2DConv training-mode forward."""
    def block(a, w, b, g, be):
        y = jax.lax.conv_general_dilated(
            a, w, window_strides=(1, 1), padding="SAME",
            dimension_numbers=("NCHW", "OIHW", "NCHW"))
        y = y + b.reshape(1, -1, 1, 1)
        mean = jnp.mean(y, axis=(0, 2, 3), keepdims=True)
        var = jnp.mean(jnp.square(y - mean), axis=(0, 2, 3), keepdims=True)
        y = (y - mean) * jax.lax.rsqrt(var + BN_EPS)
        y = y * g.reshape(1, -1, 1, 1) + be.reshape(1, -1, 1, 1)
        return jnp.maximum(y, 0.0)

    y = block(x, params["w1"], params["b1"], params["g1"], params["be1"])
    y = block(y, params["w2"], params["b2"], params["g2"], params["be2"])
    return y


if __name__ == "__main__":
    key = jax.random.PRNGKey(0)
    ks = jax.random.split(key, 8)

    B, in_dim, out_dim, H, W = 2, 4, 8, 16, 16
    x = jax.random.normal(ks[0], (B, in_dim, H, W), dtype=jnp.float32)

    def conv_init(k, o, i):
        kw, kb = jax.random.split(k)
        bound = 1.0 / ((i * KSIZE * KSIZE) ** 0.5)
        w = jax.random.uniform(kw, (o, i, KSIZE, KSIZE), jnp.float32, -bound, bound)
        b = jax.random.uniform(kb, (o,), jnp.float32, -bound, bound)
        return w, b

    w1, b1 = conv_init(ks[1], out_dim, in_dim)
    w2, b2 = conv_init(ks[2], out_dim, out_dim)
    params = dict(
        w1=w1, b1=b1,
        g1=1.0 + 0.1 * jax.random.normal(ks[3], (out_dim,), jnp.float32),
        be1=0.1 * jax.random.normal(ks[4], (out_dim,), jnp.float32),
        w2=w2, b2=b2,
        g2=1.0 + 0.1 * jax.random.normal(ks[5], (out_dim,), jnp.float32),
        be2=0.1 * jax.random.normal(ks[6], (out_dim,), jnp.float32),
    )

    out = jax.block_until_ready(double_2d_conv(x, params))
    ref = jax.block_until_ready(_reference(x, params))

    assert out.shape == (B, out_dim, H, W)
    max_err = float(jnp.max(jnp.abs(out - ref)))
    assert jnp.allclose(out, ref, atol=1e-4, rtol=1e-4), f"mismatch, max_err={max_err}"

    print("KERNEL_OK")
</pallas_src>

<mosaic_0001>
module attributes {stable_mosaic.version = 11 : i64} {
  func.func @_double_conv_kernel(%arg0: memref<4x512xf32, #tpu.memory_space<vmem>>, %arg1: memref<9x512xf32, #tpu.memory_space<vmem>>, %arg2: memref<8x36xf32, #tpu.memory_space<vmem>>, %arg3: memref<8x1xf32, #tpu.memory_space<vmem>>, %arg4: memref<8x1xf32, #tpu.memory_space<vmem>>, %arg5: memref<8x72xf32, #tpu.memory_space<vmem>>, %arg6: memref<8x1xf32, #tpu.memory_space<vmem>>, %arg7: memref<8x1xf32, #tpu.memory_space<vmem>>, %arg8: memref<8x512xf32, #tpu.memory_space<vmem>>, %arg9: memref<36x512xf32, #tpu.memory_space<vmem>>, %arg10: memref<72x512xf32, #tpu.memory_space<vmem>>) attributes {dimension_semantics = [], scalar_prefetch = 0 : i64, scratch_operands = 2 : i64, tpu.core_type = #tpu.core_type<tc>} {
    %c0 = arith.constant 0 : index
    %c0_0 = arith.constant 0 : index
    %0 = vector.load %arg0[%c0, %c0_0] : memref<4x512xf32, #tpu.memory_space<vmem>>, vector<4x512xf32>
    %c17_i32 = arith.constant 17 : i32
    %1 = tpu.dynamic_rotate %0 by %c17_i32 dim 1 : vector<4x512xf32>, i32 -> vector<4x512xf32>
    %c0_1 = arith.constant 0 : index
    %c0_2 = arith.constant 0 : index
    %2 = vector.load %arg1[%c0_1, %c0_2] : memref<9x512xf32, #tpu.memory_space<vmem>>, vector<1x512xf32>
    %3 = vector.broadcast %2 : vector<1x512xf32> to vector<4x512xf32>
    %4 = arith.mulf %1, %3 : vector<4x512xf32>
    %c0_3 = arith.constant 0 : index
    %c0_4 = arith.constant 0 : index
    %5 = vector.load %arg9[%c0_3, %c0_4] : memref<36x512xf32, #tpu.memory_space<vmem>>, vector<4x512xf32>
    tpu.vector_store %arg9[%c0_3, %c0_4], %4 {strides = array<i32>} : memref<36x512xf32, #tpu.memory_space<vmem>>, vector<4x512xf32>,
    %c16_i32 = arith.constant 16 : i32
    %6 = tpu.dynamic_rotate %0 by %c16_i32 dim 1 : vector<4x512xf32>, i32 -> vector<4x512xf32>
    %c1 = arith.constant 1 : index
    %c0_5 = arith.constant 0 : index
    %7 = vector.load %arg1[%c1, %c0_5] : memref<9x512xf32, #tpu.memory_space<vmem>>, vector<1x512xf32>
    %8 = vector.broadcast %7 : vector<1x512xf32> to vector<4x512xf32>
    %9 = arith.mulf %6, %8 : vector<4x512xf32>
    %c4 = arith.constant 4 : index
    %c0_6 = arith.constant 0 : index
    %10 = vector.load %arg9[%c4, %c0_6] : memref<36x512xf32, #tpu.memory_space<vmem>>, vector<4x512xf32>
    tpu.vector_store %arg9[%c4, %c0_6], %9 {strides = array<i32>} : memref<36x512xf32, #tpu.memory_space<vmem>>, vector<4x512xf32>,
    %c15_i32 = arith.constant 15 : i32
    %11 = tpu.dynamic_rotate %0 by %c15_i32 dim 1 : vector<4x512xf32>, i32 -> vector<4x512xf32>
    %c2 = arith.constant 2 : index
    %c0_7 = arith.constant 0 : index
    %12 = vector.load %arg1[%c2, %c0_7] : memref<9x512xf32, #tpu.memory_space<vmem>>, vector<1x512xf32>
    %13 = vector.broadcast %12 : vector<1x512xf32> to vector<4x512xf32>
    %14 = arith.mulf %11, %13 : vector<4x512xf32>
    %c8 = arith.constant 8 : index
    %c0_8 = arith.constant 0 : index
    %15 = vector.load %arg9[%c8, %c0_8] : memref<36x512xf32, #tpu.memory_space<vmem>>, vector<4x512xf32>
    tpu.vector_store %arg9[%c8, %c0_8], %14 {strides = array<i32>} : memref<36x512xf32, #tpu.memory_space<vmem>>, vector<4x512xf32>,
    %c1_i32 = arith.constant 1 : i32
    %16 = tpu.dynamic_rotate %0 by %c1_i32 dim 1 : vector<4x512xf32>, i32 -> vector<4x512xf32>
    %c3 = arith.constant 3 : index
    %c0_9 = arith.constant 0 : index
    %17 = vector.load %arg1[%c3, %c0_9] : memref<9x512xf32, #tpu.memory_space<vmem>>, vector<1x512xf32>
    %18 = vector.broadcast %17 : vector<1x512xf32> to vector<4x512xf32>
    %19 = arith.mulf %16, %18 : vector<4x512xf32>
    %c12 = arith.constant 12 : index
    %c0_10 = arith.constant 0 : index
    %20 = vector.load %arg9[%c12, %c0_10] : memref<36x512xf32, #tpu.memory_space<vmem>>, vector<4x512xf32>
    tpu.vector_store %arg9[%c12, %c0_10], %19 {strides = array<i32>} : memref<36x512xf32, #tpu.memory_space<vmem>>, vector<4x512xf32>,
    %c4_11 = arith.constant 4 : index
    %c0_12 = arith.constant 0 : index
    %21 = vector.load %arg1[%c4_11, %c0_12] : memref<9x512xf32, #tpu.memory_space<vmem>>, vector<1x512xf32>
    %22 = vector.broadcast %21 : vector<1x512xf32> to vector<4x512xf32>
    %23 = arith.mulf %0, %22 : vector<4x512xf32>
    %c16 = arith.constant 16 : index
    %c0_13 = arith.constant 0 : index
    %24 = vector.load %arg9[%c16, %c0_13] : memref<36x512xf32, #tpu.memory_space<vmem>>, vector<4x512xf32>
    tpu.vector_store %arg9[%c16, %c0_13], %23 {strides = array<i32>} : memref<36x512xf32, #tpu.memory_space<vmem>>, vector<4x512xf32>,
    %c511_i32 = arith.constant 511 : i32
    %25 = tpu.dynamic_rotate %0 by %c511_i32 dim 1 : vector<4x512xf32>, i32 -> vector<4x512xf32>
    %c5 = arith.constant 5 : index
    %c0_14 = arith.constant 0 : index
    %26 = vector.load %arg1[%c5, %c0_14] : memref<9x512xf32, #tpu.memory_space<vmem>>, vector<1x512xf32>
    %27 = vector.broadcast %26 : vector<1x512xf32> to vector<4x512xf32>
    %28 = arith.mulf %25, %27 : vector<4x512xf32>
    %c20 = arith.constant 20 : index
    %c0_15 = arith.constant 0 : index
    %29 = vector.load %arg9[%c20, %c0_15] : memref<36x512xf32, #tpu.memory_space<vmem>>, vector<4x512xf32>
    tpu.vector_store %arg9[%c20, %c0_15], %28 {strides = array<i32>} : memref<36x512xf32, #tpu.memory_space<vmem>>, vector<4x512xf32>,
    %c497_i32 = arith.constant 497 : i32
    %30 = tpu.dynamic_rotate %0 by %c497_i32 dim 1 : vector<4x512xf32>, i32 -> vector<4x512xf32>
    %c6 = arith.constant 6 : index
    %c0_16 = arith.constant 0 : index
    %31 = vector.load %arg1[%c6, %c0_16] : memref<9x512xf32, #tpu.memory_space<vmem>>, vector<1x512xf32>
    %32 = vector.broadcast %31 : vector<1x512xf32> to vector<4x512xf32>
    %33 = arith.mulf %30, %32 : vector<4x512xf32>
    %c24 = arith.constant 24 : index
    %c0_17 = arith.constant 0 : index
    %34 = vector.load %arg9[%c24, %c0_17] : memref<36x512xf32, #tpu.memory_space<vmem>>, vector<4x512xf32>
    tpu.vector_store %arg9[%c24, %c0_17], %33 {strides = array<i32>} : memref<36x512xf32, #tpu.memory_space<vmem>>, vector<4x512xf32>,
    %c496_i32 = arith.constant 496 : i32
    %35 = tpu.dynamic_rotate %0 by %c496_i32 dim 1 : vector<4x512xf32>, i32 -> vector<4x512xf32>
    %c7 = arith.constant 7 : index
    %c0_18 = arith.constant 0 : index
    %36 = vector.load %arg1[%c7, %c0_18] : memref<9x512xf32, #tpu.memory_space<vmem>>, vector<1x512xf32>
    %37 = vector.broadcast %36 : vector<1x512xf32> to vector<4x512xf32>
    %38 = arith.mulf %35, %37 : vector<4x512xf32>
    %c28 = arith.constant 28 : index
    %c0_19 = arith.constant 0 : index
    %39 = vector.load %arg9[%c28, %c0_19] : memref<36x512xf32, #tpu.memory_space<vmem>>, vector<4x512xf32>
    tpu.vector_store %arg9[%c28, %c0_19], %38 {strides = array<i32>} : memref<36x512xf32, #tpu.memory_space<vmem>>, vector<4x512xf32>,
    %c495_i32 = arith.constant 495 : i32
    %40 = tpu.dynamic_rotate %0 by %c495_i32 dim 1 : vector<4x512xf32>, i32 -> vector<4x512xf32>
    %c8_20 = arith.constant 8 : index
    %c0_21 = arith.constant 0 : index
    %41 = vector.load %arg1[%c8_20, %c0_21] : memref<9x512xf32, #tpu.memory_space<vmem>>, vector<1x512xf32>
    %42 = vector.broadcast %41 : vector<1x512xf32> to vector<4x512xf32>
    %43 = arith.mulf %40, %42 : vector<4x512xf32>
    %c32 = arith.constant 32 : index
    %c0_22 = arith.constant 0 : index
    %44 = vector.load %arg9[%c32, %c0_22] : memref<36x512xf32, #tpu.memory_space<vmem>>, vector<4x512xf32>
    tpu.vector_store %arg9[%c32, %c0_22], %43 {strides = array<i32>} : memref<36x512xf32, #tpu.memory_space<vmem>>, vector<4x512xf32>,
    %c0_23 = arith.constant 0 : index
    %c0_24 = arith.constant 0 : index
    %45 = vector.load %arg2[%c0_23, %c0_24] : memref<8x36xf32, #tpu.memory_space<vmem>>, vector<8x36xf32>
    %c0_25 = arith.constant 0 : index
    %c0_26 = arith.constant 0 : index
    %46 = vector.load %arg9[%c0_25, %c0_26] : memref<36x512xf32, #tpu.memory_space<vmem>>, vector<36x512xf32>
    %cst = arith.constant dense<0.000000e+00> : vector<8x512xf32>
    %47 = tpu.matmul %45, %46, %cst {dimension_numbers = #tpu.dot_dimension_numbers<[1], [0], [0], [1], [0, 0, 1, 1], [], []>} : vector<8x36xf32>, vector<36x512xf32>, vector<8x512xf32> -> vector<8x512xf32>
    %cst_27 = arith.constant dense<0.000000e+00> : vector<8xf32>
    %48 = vector.multi_reduction <add>, %47, %cst_27 [1] : vector<8x512xf32> to vector<8xf32>
    %49 = vector.shape_cast %48 : vector<8xf32> to vector<8x1xf32>
    %cst_28 = arith.constant 5.120000e+02 : f32
    %50 = vector.broadcast %cst_28 : f32 to vector<8x1xf32>
    %51 = arith.divf %49, %50 : vector<8x1xf32>
    %52 = arith.mulf %47, %47 : vector<8x512xf32>
    %cst_29 = arith.constant dense<0.000000e+00> : vector<8xf32>
    %53 = vector.multi_reduction <add>, %52, %cst_29 [1] : vector<8x512xf32> to vector<8xf32>
    %54 = vector.shape_cast %53 : vector<8xf32> to vector<8x1xf32>
    %cst_30 = arith.constant 5.120000e+02 : f32
    %55 = vector.broadcast %cst_30 : f32 to vector<8x1xf32>
    %56 = arith.divf %54, %55 : vector<8x1xf32>
    %57 = arith.mulf %51, %51 : vector<8x1xf32>
    %58 = arith.subf %56, %57 : vector<8x1xf32>
    %c0_31 = arith.constant 0 : index
    %c0_32 = arith.constant 0 : index
    %59 = vector.load %arg3[%c0_31, %c0_32] : memref<8x1xf32, #tpu.memory_space<vmem>>, vector<8x1xf32>
    %cst_33 = arith.constant 9.99999974E-6 : f32
    %60 = vector.broadcast %cst_33 : f32 to vector<8x1xf32>
    %61 = arith.addf %58, %60 : vector<8x1xf32>
    %62 = math.rsqrt %61 : vector<8x1xf32>
    %63 = arith.mulf %59, %62 : vector<8x1xf32>
    %c0_34 = arith.constant 0 : index
    %c0_35 = arith.constant 0 : index
    %64 = vector.load %arg4[%c0_34, %c0_35] : memref<8x1xf32, #tpu.memory_space<vmem>>, vector<8x1xf32>
    %65 = arith.mulf %51, %63 : vector<8x1xf32>
    %66 = arith.subf %64, %65 : vector<8x1xf32>
    %67 = vector.broadcast %63 : vector<8x1xf32> to vector<8x512xf32>
    %68 = arith.mulf %47, %67 : vector<8x512xf32>
    %69 = vector.broadcast %66 : vector<8x1xf32> to vector<8x512xf32>
    %70 = arith.addf %68, %69 : vector<8x512xf32>
    %cst_36 = arith.constant 0.000000e+00 : f32
    %71 = vector.broadcast %cst_36 : f32 to vector<8x512xf32>
    %72 = arith.maximumf %70, %71 : vector<8x512xf32>
    %c17_i32_37 = arith.constant 17 : i32
    %73 = tpu.dynamic_rotate %72 by %c17_i32_37 dim 1 : vector<8x512xf32>, i32 -> vector<8x512xf32>
    %c0_38 = arith.constant 0 : index
    %c0_39 = arith.constant 0 : index
    %74 = vector.load %arg1[%c0_38, %c0_39] : memref<9x512xf32, #tpu.memory_space<vmem>>, vector<1x512xf32>
    %75 = vector.broadcast %74 : vector<1x512xf32> to vector<8x512xf32>
    %76 = arith.mulf %73, %75 : vector<8x512xf32>
    %c0_40 = arith.constant 0 : index
    %c0_41 = arith.constant 0 : index
    %77 = vector.load %arg10[%c0_40, %c0_41] : memref<72x512xf32, #tpu.memory_space<vmem>>, vector<8x512xf32>
    tpu.vector_store %arg10[%c0_40, %c0_41], %76 {strides = array<i32>} : memref<72x512xf32, #tpu.memory_space<vmem>>, vector<8x512xf32>,
    %c16_i32_42 = arith.constant 16 : i32
    %78 = tpu.dynamic_rotate %72 by %c16_i32_42 dim 1 : vector<8x512xf32>, i32 -> vector<8x512xf32>
    %c1_43 = arith.constant 1 : index
    %c0_44 = arith.constant 0 : index
    %79 = vector.load %arg1[%c1_43, %c0_44] : memref<9x512xf32, #tpu.memory_space<vmem>>, vector<1x512xf32>
    %80 = vector.broadcast %79 : vector<1x512xf32> to vector<8x512xf32>
    %81 = arith.mulf %78, %80 : vector<8x512xf32>
    %c8_45 = arith.constant 8 : index
    %c0_46 = arith.constant 0 : index
    %82 = vector.load %arg10[%c8_45, %c0_46] : memref<72x512xf32, #tpu.memory_space<vmem>>, vector<8x512xf32>
    tpu.vector_store %arg10[%c8_45, %c0_46], %81 {strides = array<i32>} : memref<72x512xf32, #tpu.memory_space<vmem>>, vector<8x512xf32>,
    %c15_i32_47 = arith.constant 15 : i32
    %83 = tpu.dynamic_rotate %72 by %c15_i32_47 dim 1 : vector<8x512xf32>, i32 -> vector<8x512xf32>
    %c2_48 = arith.constant 2 : index
    %c0_49 = arith.constant 0 : index
    %84 = vector.load %arg1[%c2_48, %c0_49] : memref<9x512xf32, #tpu.memory_space<vmem>>, vector<1x512xf32>
    %85 = vector.broadcast %84 : vector<1x512xf32> to vector<8x512xf32>
    %86 = arith.mulf %83, %85 : vector<8x512xf32>
    %c16_50 = arith.constant 16 : index
    %c0_51 = arith.constant 0 : index
    %87 = vector.load %arg10[%c16_50, %c0_51] : memref<72x512xf32, #tpu.memory_space<vmem>>, vector<8x512xf32>
    tpu.vector_store %arg10[%c16_50, %c0_51], %86 {strides = array<i32>} : memref<72x512xf32, #tpu.memory_space<vmem>>, vector<8x512xf32>,
    %c1_i32_52 = arith.constant 1 : i32
    %88 = tpu.dynamic_rotate %72 by %c1_i32_52 dim 1 : vector<8x512xf32>, i32 -> vector<8x512xf32>
    %c3_53 = arith.constant 3 : index
    %c0_54 = arith.constant 0 : index
    %89 = vector.load %arg1[%c3_53, %c0_54] : memref<9x512xf32, #tpu.memory_space<vmem>>, vector<1x512xf32>
    %90 = vector.broadcast %89 : vector<1x512xf32> to vector<8x512xf32>
    %91 = arith.mulf %88, %90 : vector<8x512xf32>
    %c24_55 = arith.constant 24 : index
    %c0_56 = arith.constant 0 : index
    %92 = vector.load %arg10[%c24_55, %c0_56] : memref<72x512xf32, #tpu.memory_space<vmem>>, vector<8x512xf32>
    tpu.vector_store %arg10[%c24_55, %c0_56], %91 {strides = array<i32>} : memref<72x512xf32, #tpu.memory_space<vmem>>, vector<8x512xf32>,
    %c4_57 = arith.constant 4 : index
    %c0_58 = arith.constant 0 : index
    %93 = vector.load %arg1[%c4_57, %c0_58] : memref<9x512xf32, #tpu.memory_space<vmem>>, vector<1x512xf32>
    %94 = vector.broadcast %93 : vector<1x512xf32> to vector<8x512xf32>
    %95 = arith.mulf %72, %94 : vector<8x512xf32>
    %c32_59 = arith.constant 32 : index
    %c0_60 = arith.constant 0 : index
    %96 = vector.load %arg10[%c32_59, %c0_60] : memref<72x512xf32, #tpu.memory_space<vmem>>, vector<8x512xf32>
    tpu.vector_store %arg10[%c32_59, %c0_60], %95 {strides = array<i32>} : memref<72x512xf32, #tpu.memory_space<vmem>>, vector<8x512xf32>,
    %c511_i32_61 = arith.constant 511 : i32
    %97 = tpu.dynamic_rotate %72 by %c511_i32_61 dim 1 : vector<8x512xf32>, i32 -> vector<8x512xf32>
    %c5_62 = arith.constant 5 : index
    %c0_63 = arith.constant 0 : index
    %98 = vector.load %arg1[%c5_62, %c0_63] : memref<9x512xf32, #tpu.memory_space<vmem>>, vector<1x512xf32>
    %99 = vector.broadcast %98 : vector<1x512xf32> to vector<8x512xf32>
    %100 = arith.mulf %97, %99 : vector<8x512xf32>
    %c40 = arith.constant 40 : index
    %c0_64 = arith.constant 0 : index
    %101 = vector.load %arg10[%c40, %c0_64] : memref<72x512xf32, #tpu.memory_space<vmem>>, vector<8x512xf32>
    tpu.vector_store %arg10[%c40, %c0_64], %100 {strides = array<i32>} : memref<72x512xf32, #tpu.memory_space<vmem>>, vector<8x512xf32>,
    %c497_i32_65 = arith.constant 497 : i32
    %102 = tpu.dynamic_rotate %72 by %c497_i32_65 dim 1 : vector<8x512xf32>, i32 -> vector<8x512xf32>
    %c6_66 = arith.constant 6 : index
    %c0_67 = arith.constant 0 : index
    %103 = vector.load %arg1[%c6_66, %c0_67] : memref<9x512xf32, #tpu.memory_space<vmem>>, vector<1x512xf32>
    %104 = vector.broadcast %103 : vector<1x512xf32> to vector<8x512xf32>
    %105 = arith.mulf %102, %104 : vector<8x512xf32>
    %c48 = arith.constant 48 : index
    %c0_68 = arith.constant 0 : index
    %106 = vector.load %arg10[%c48, %c0_68] : memref<72x512xf32, #tpu.memory_space<vmem>>, vector<8x512xf32>
    tpu.vector_store %arg10[%c48, %c0_68], %105 {strides = array<i32>} : memref<72x512xf32, #tpu.memory_space<vmem>>, vector<8x512xf32>,
    %c496_i32_69 = arith.constant 496 : i32
    %107 = tpu.dynamic_rotate %72 by %c496_i32_69 dim 1 : vector<8x512xf32>, i32 -> vector<8x512xf32>
    %c7_70 = arith.constant 7 : index
    %c0_71 = arith.constant 0 : index
    %108 = vector.load %arg1[%c7_70, %c0_71] : memref<9x512xf32, #tpu.memory_space<vmem>>, vector<1x512xf32>
    %109 = vector.broadcast %108 : vector<1x512xf32> to vector<8x512xf32>
    %110 = arith.mulf %107, %109 : vector<8x512xf32>
    %c56 = arith.constant 56 : index
    %c0_72 = arith.constant 0 : index
    %111 = vector.load %arg10[%c56, %c0_72] : memref<72x512xf32, #tpu.memory_space<vmem>>, vector<8x512xf32>
    tpu.vector_store %arg10[%c56, %c0_72], %110 {strides = array<i32>} : memref<72x512xf32, #tpu.memory_space<vmem>>, vector<8x512xf32>,
    %c495_i32_73 = arith.constant 495 : i32
    %112 = tpu.dynamic_rotate %72 by %c495_i32_73 dim 1 : vector<8x512xf32>, i32 -> vector<8x512xf32>
    %c8_74 = arith.constant 8 : index
    %c0_75 = arith.constant 0 : index
    %113 = vector.load %arg1[%c8_74, %c0_75] : memref<9x512xf32, #tpu.memory_space<vmem>>, vector<1x512xf32>
    %114 = vector.broadcast %113 : vector<1x512xf32> to vector<8x512xf32>
    %115 = arith.mulf %112, %114 : vector<8x512xf32>
    %c64 = arith.constant 64 : index
    %c0_76 = arith.constant 0 : index
    %116 = vector.load %arg10[%c64, %c0_76] : memref<72x512xf32, #tpu.memory_space<vmem>>, vector<8x512xf32>
    tpu.vector_store %arg10[%c64, %c0_76], %115 {strides = array<i32>} : memref<72x512xf32, #tpu.memory_space<vmem>>, vector<8x512xf32>,
    %c0_77 = arith.constant 0 : index
    %c0_78 = arith.constant 0 : index
    %117 = vector.load %arg5[%c0_77, %c0_78] : memref<8x72xf32, #tpu.memory_space<vmem>>, vector<8x72xf32>
    %c0_79 = arith.constant 0 : index
    %c0_80 = arith.constant 0 : index
    %118 = vector.load %arg10[%c0_79, %c0_80] : memref<72x512xf32, #tpu.memory_space<vmem>>, vector<72x512xf32>
    %cst_81 = arith.constant dense<0.000000e+00> : vector<8x512xf32>
    %119 = tpu.matmul %117, %118, %cst_81 {dimension_numbers = #tpu.dot_dimension_numbers<[1], [0], [0], [1], [0, 0, 1, 1], [], []>} : vector<8x72xf32>, vector<72x512xf32>, vector<8x512xf32> -> vector<8x512xf32>
    %cst_82 = arith.constant dense<0.000000e+00> : vector<8xf32>
    %120 = vector.multi_reduction <add>, %119, %cst_82 [1] : vector<8x512xf32> to vector<8xf32>
    %121 = vector.shape_cast %120 : vector<8xf32> to vector<8x1xf32>
    %cst_83 = arith.constant 5.120000e+02 : f32
    %122 = vector.broadcast %cst_83 : f32 to vector<8x1xf32>
    %123 = arith.divf %121, %122 : vector<8x1xf32>
    %124 = arith.mulf %119, %119 : vector<8x512xf32>
    %cst_84 = arith.constant dense<0.000000e+00> : vector<8xf32>
    %125 = vector.multi_reduction <add>, %124, %cst_84 [1] : vector<8x512xf32> to vector<8xf32>
    %126 = vector.shape_cast %125 : vector<8xf32> to vector<8x1xf32>
    %cst_85 = arith.constant 5.120000e+02 : f32
    %127 = vector.broadcast %cst_85 : f32 to vector<8x1xf32>
    %128 = arith.divf %126, %127 : vector<8x1xf32>
    %129 = arith.mulf %123, %123 : vector<8x1xf32>
    %130 = arith.subf %128, %129 : vector<8x1xf32>
    %c0_86 = arith.constant 0 : index
    %c0_87 = arith.constant 0 : index
    %131 = vector.load %arg6[%c0_86, %c0_87] : memref<8x1xf32, #tpu.memory_space<vmem>>, vector<8x1xf32>
    %cst_88 = arith.constant 9.99999974E-6 : f32
    %132 = vector.broadcast %cst_88 : f32 to vector<8x1xf32>
    %133 = arith.addf %130, %132 : vector<8x1xf32>
    %134 = math.rsqrt %133 : vector<8x1xf32>
    %135 = arith.mulf %131, %134 : vector<8x1xf32>
    %c0_89 = arith.constant 0 : index
    %c0_90 = arith.constant 0 : index
    %136 = vector.load %arg7[%c0_89, %c0_90] : memref<8x1xf32, #tpu.memory_space<vmem>>, vector<8x1xf32>
    %137 = arith.mulf %123, %135 : vector<8x1xf32>
    %138 = arith.subf %136, %137 : vector<8x1xf32>
    %139 = vector.broadcast %135 : vector<8x1xf32> to vector<8x512xf32>
    %140 = arith.mulf %119, %139 : vector<8x512xf32>
    %141 = vector.broadcast %138 : vector<8x1xf32> to vector<8x512xf32>
    %142 = arith.addf %140, %141 : vector<8x512xf32>
    %cst_91 = arith.constant 0.000000e+00 : f32
    %143 = vector.broadcast %cst_91 : f32 to vector<8x512xf32>
    %144 = arith.maximumf %142, %143 : vector<8x512xf32>
    %c0_92 = arith.constant 0 : index
    %c0_93 = arith.constant 0 : index
    %145 = vector.load %arg8[%c0_92, %c0_93] : memref<8x512xf32, #tpu.memory_space<vmem>>, vector<8x512xf32>
    tpu.vector_store %arg8[%c0_92, %c0_93], %144 {strides = array<i32>} : memref<8x512xf32, #tpu.memory_space<vmem>>, vector<8x512xf32>,
    return
  }
}

</mosaic_0001>

<llo_original>
// kernel: tpu_custom_call.1
$region0: #{tpu_custom_call.1}
  #allocation0 [shape = 'u32[]', space=smem, size = 0x4, offset = 0x4, fixed_abs, tag = 'smem constant byte address 0x4 - core index']
  #allocation1 [shape = 'u32[144,128]{1,0:T(1,128)}', space=vmem, size = 0x12000, scoped, tag = 'internal scratch']
  #allocation2 [shape = 'f32[36,512]{1,0:T(8,128)}', space=vmem, size = 0x14000, scoped, tag = 'scratch operand']
  #allocation3 [shape = 'f32[72,512]{1,0:T(8,128)}', space=vmem, size = 0x24000, scoped, tag = 'scratch operand']
  %s0 = inlined_call_operand.vmem [shape: f32[4,512], index: 0, kind: input, shape index: {}]
  %s1 = inlined_call_operand.hbm [shape: f32[9,512], index: 1, kind: input, shape index: {}]
  %s2 = inlined_call_operand.vmem [shape: f32[8,36], index: 2, kind: input, shape index: {}]
  %s3 = inlined_call_operand.vmem [shape: f32[8,1], index: 3, kind: input, shape index: {}]
  %s4 = inlined_call_operand.vmem [shape: f32[8,1], index: 4, kind: input, shape index: {}]
  %s5 = inlined_call_operand.vmem [shape: f32[8,72], index: 5, kind: input, shape index: {}]
  %s6 = inlined_call_operand.vmem [shape: f32[8,1], index: 6, kind: input, shape index: {}]
  %s7 = inlined_call_operand.vmem [shape: f32[8,1], index: 7, kind: input, shape index: {}]
  %s8 = inlined_call_operand.hbm [shape: f32[8,512], index: 8, kind: output, shape index: {}]
  %s9 = sld [smem:[#allocation0]]
  $region46: #{tpu_custom_call.1} parent=0
    _
  %s11 = ssub.s32 1, %s9
  %s12 = scalar_select 0, %s11, %s9
  $region1: #{tpu_custom_call.1} parent=0
    #allocation4 [shape = 'u8[32768]{0}', space=vmem, size = 0x8000, scoped, tag = 'input window, operand 1, single buffered']
    #allocation5 [shape = 's32[1]{0}', space=sflag, size = 0x4, scoped, tag = 'scoped memory for tpu_custom_call.1']
    #allocation6 [shape = 's32[1]{0}', space=sflag, size = 0x4, scoped, tag = 'scoped memory for tpu_custom_call.1']
    #allocation7 [shape = 'u8[16384]{0}', space=vmem, size = 0x4000, scoped, tag = 'output window, operand 0, single buffered']
    %13 = vsyncpa [#allocation5], 0
    %14 = vsyncpa [#allocation6], 0
    // Predicated region
    $region2: #{tpu_custom_call.1} parent=1 // pred_check
      _
    $region3: #{tpu_custom_call.1} parent=1 // pred_check_branch
      %16 = sbr.rel (0) target = $region5
    $region4: #{tpu_custom_call.1} parent=1 // pred_region
      _
    $region5: #{tpu_custom_call.1} parent=1 // pred_fallthru
      _
    // Predicated region
    $region6: #{tpu_custom_call.1} parent=1 // pred_check
      _
    $region7: #{tpu_custom_call.1} parent=1 // pred_check_branch
      %18 = sbr.rel (0) target = $region9
    $region8: #{tpu_custom_call.1} parent=1 // pred_region
      %s20 = ssub.s32 1024, 1024
      %21 = vsyncadd [#allocation5], %s20
      %s22 = sshll.u32 [#allocation4], 4
      %s23 = int_to_ptr.vmem [resolvable:$true] %s22
      %28 = dma.hbm_to_vmem [thread:$0]  %s1, 1024, %s23, [#allocation5], 512, 512, 32
    $region9: #{tpu_custom_call.1} parent=1 // pred_fallthru
      _
    // Predicated region
    $region10: #{tpu_custom_call.1} parent=1 // pred_check
      _
    $region11: #{tpu_custom_call.1} parent=1 // pred_check_branch
      %30 = sbr.rel (0) target = $region13
    $region12: #{tpu_custom_call.1} parent=1 // pred_region
      _
    $region13: #{tpu_custom_call.1} parent=1 // pred_fallthru
      _
    // Predicated region
    $region14: #{tpu_custom_call.1} parent=1 // pred_check
      _
    $region15: #{tpu_custom_call.1} parent=1 // pred_check_branch
      %32 = sbr.rel (0) target = $region17
    $region16: #{tpu_custom_call.1} parent=1 // pred_region
      _
    $region17: #{tpu_custom_call.1} parent=1 // pred_fallthru
      _
    // Predicated region
    $region18: #{tpu_custom_call.1} parent=1 // pred_check
      _
    $region19: #{tpu_custom_call.1} parent=1 // pred_check_branch
      %34 = sbr.rel (0) target = $region21
    $region20: #{tpu_custom_call.1} parent=1 // pred_region
      _
    $region21: #{tpu_custom_call.1} parent=1 // pred_fallthru
      _
    // Predicated region
    $region22: #{tpu_custom_call.1} parent=1 // pred_check
      _
    $region23: #{tpu_custom_call.1} parent=1 // pred_check_branch
      %36 = sbr.rel (0) target = $region25
    $region24: #{tpu_custom_call.1} parent=1 // pred_region
      _
    $region25: #{tpu_custom_call.1} parent=1 // pred_fallthru
      _
    // Predicated region
    $region26: #{tpu_custom_call.1} parent=1 // pred_check
      _
    $region27: #{tpu_custom_call.1} parent=1 // pred_check_branch
      %38 = sbr.rel (0) target = $region29
    $region28: #{tpu_custom_call.1} parent=1 // pred_region
      _
    $region29: #{tpu_custom_call.1} parent=1 // pred_fallthru
      _
    // Predicated region
    $region30: #{tpu_custom_call.1} parent=1 // pred_check
      _
    $region31: #{tpu_custom_call.1} parent=1 // pred_check_branch
      %40 = sbr.rel (0) target = $region33
    $region32: #{tpu_custom_call.1} parent=1 // pred_region
      _
    $region33: #{tpu_custom_call.1} parent=1 // pred_fallthru
      _
    // Predicated region
    $region34: #{tpu_custom_call.1} parent=1 // pred_check
      _
    $region35: #{tpu_custom_call.1} parent=1 // pred_check_branch
      %42 = sbr.rel (0) target = $region37
    $region36: #{tpu_custom_call.1} parent=1 // pred_region
      %43 = dma.done [#allocation5], 1024
    $region37: #{tpu_custom_call.1} parent=1 // pred_fallthru
      _
    %v44 = vld [vmem:[%s0] sm:$0xff]
    %v45 = vld [vmem:[%s0 + $0x8] sm:$0xff]
    %v48 = vcombine.high %v44, %v44
    %v49 = vcombine.high %v45, %v45
    %52 = vrot.lane.b32.xlu0 %v44, 17
    %v53 = vpop.permute.xlu0 %52
    %54 = vrot.lane.b32.xlu0 %v48, 17
    %v55 = vpop.permute.xlu0 %54
    %56 = vrot.lane.b32.xlu0 %v45, 17
    %v57 = vpop.permute.xlu0 %56
    %58 = vrot.lane.b32.xlu0 %v49, 17
    %v59 = vpop.permute.xlu0 %58
    %v60 = vlaneseq
    %v61 = vand.u32 %v60, 127
    %vm62 = vcmp.lt.s32.totalorder %v61, 17
    %v63 = vsel %vm62, %v57, %v59
    %v64 = vsel %vm62, %v55, %v57
    %v65 = vsel %vm62, %v53, %v55
    %v66 = vsel %vm62, %v59, %v53
    %v67 = vld [vmem:[#allocation4] ss:$8 sm:$0xf]
    %v69 = vlaneseq
    %v70 = vshrl.u32 %v69, 7
    %v71 = vsub.s32 0, %v70
    %v72 = vrot.slane %v67, %v71
    %v73 = vlaneseq
    %v74 = vshrl.u32 %v73, 7
    %v75 = vsub.s32 1, %v74
    %v76 = vrot.slane %v67, %v75
    %v77 = vlaneseq
    %v78 = vshrl.u32 %v77, 7
    %v79 = vsub.s32 2, %v78
    %v80 = vrot.slane %v67, %v79
    %v81 = vlaneseq
    %v82 = vshrl.u32 %v81, 7
    %v83 = vsub.s32 3, %v82
    %v84 = vrot.slane %v67, %v83
    %v89 = vmul.f32 %v66, %v72
    %v90 = vmul.f32 %v65, %v76
    %v91 = vmul.f32 %v64, %v80
    %v92 = vmul.f32 %v63, %v84
    %93 = vst [vmem:[#allocation2] sm:$0xf] %v89
    %94 = vst [vmem:[#allocation2 + $0x8] sm:$0xf] %v90
    %95 = vst [vmem:[#allocation2 + $0x10] sm:$0xf] %v91
    %96 = vst [vmem:[#allocation2 + $0x18] sm:$0xf] %v92
    %97 = vrot.lane.b32.xlu0 %v44, 16
    %v98 = vpop.permute.xlu0 %97
    %99 = vrot.lane.b32.xlu0 %v48, 16
    %v100 = vpop.permute.xlu0 %99
    %101 = vrot.lane.b32.xlu0 %v45, 16
    %v102 = vpop.permute.xlu0 %101
    %103 = vrot.lane.b32.xlu0 %v49, 16
    %v104 = vpop.permute.xlu0 %103
    %vm105 = vcmp.lt.s32.totalorder %v61, 16
    %v106 = vsel %vm105, %v102, %v104
    %v107 = vsel %vm105, %v100, %v102
    %v108 = vsel %vm105, %v98, %v100
    %v109 = vsel %vm105, %v104, %v98
    %s110 = scalar_lea.vmem [#allocation4], 1
    %v111 = vld [vmem:[%s110] ss:$8 sm:$0xf]
    %v113 = vlaneseq
    %v114 = vshrl.u32 %v113, 7
    %v115 = vsub.s32 0, %v114
    %v116 = vrot.slane %v111, %v115
    %v117 = vlaneseq
    %v118 = vshrl.u32 %v117, 7
    %v119 = vsub.s32 1, %v118
    %v120 = vrot.slane %v111, %v119
    %v121 = vlaneseq
    %v122 = vshrl.u32 %v121, 7
    %v123 = vsub.s32 2, %v122
    %v124 = vrot.slane %v111, %v123
    %v125 = vlaneseq
    %v126 = vshrl.u32 %v125, 7
    %v127 = vsub.s32 3, %v126
    %v128 = vrot.slane %v111, %v127
    %v133 = vmul.f32 %v109, %v116
    %v134 = vmul.f32 %v108, %v120
    %v135 = vmul.f32 %v107, %v124
    %v136 = vmul.f32 %v106, %v128
    %v141 = vrot.slane %v133, 4
    %v142 = vrot.slane %v134, 4
    %v143 = vrot.slane %v135, 4
    %v144 = vrot.slane %v136, 4
    %149 = vst [vmem:[#allocation2] sm:$0xf0] %v141
    %150 = vst [vmem:[#allocation2 + $0x8] sm:$0xf0] %v142
    %151 = vst [vmem:[#allocation2 + $0x10] sm:$0xf0] %v143
    %152 = vst [vmem:[#allocation2 + $0x18] sm:$0xf0] %v144
    %153 = vrot.lane.b32.xlu0 %v44, 15
    %v154 = vpop.permute.xlu0 %153
    %155 = vrot.lane.b32.xlu0 %v48, 15
    %v156 = vpop.permute.xlu0 %155
    %157 = vrot.lane.b32.xlu0 %v45, 15
    %v158 = vpop.permute.xlu0 %157
    %159 = vrot.lane.b32.xlu0 %v49, 15
    %v160 = vpop.permute.xlu0 %159
    %vm161 = vcmp.lt.s32.totalorder %v61, 15
    %v162 = vsel %vm161, %v158, %v160
    %v163 = vsel %vm161, %v156, %v158
    %v164 = vsel %vm161, %v154, %v156
    %v165 = vsel %vm161, %v160, %v154
    %s166 = scalar_lea.vmem [#allocation4], 2
    %v167 = vld [vmem:[%s166] ss:$8 sm:$0xf]
    %v169 = vlaneseq
    %v170 = vshrl.u32 %v169, 7
    %v171 = vsub.s32 0, %v170
    %v172 = vrot.slane %v167, %v171
    %v173 = vlaneseq
    %v174 = vshrl.u32 %v173, 7
    %v175 = vsub.s32 1, %v174
    %v176 = vrot.slane %v167, %v175
    %v177 = vlaneseq
    %v178 = vshrl.u32 %v177, 7
    %v179 = vsub.s32 2, %v178
    %v180 = vrot.slane %v167, %v179
    %v181 = vlaneseq
    %v182 = vshrl.u32 %v181, 7
    %v183 = vsub.s32 3, %v182
    %v184 = vrot.slane %v167, %v183
    %v189 = vmul.f32 %v165, %v172
    %v190 = vmul.f32 %v164, %v176
    %v191 = vmul.f32 %v163, %v180
    %v192 = vmul.f32 %v162, %v184
    %193 = vst [vmem:[#allocation2 + $0x20] sm:$0xf] %v189
    %194 = vst [vmem:[#allocation2 + $0x28] sm:$0xf] %v190
    %195 = vst [vmem:[#allocation2 + $0x30] sm:$0xf] %v191
    %196 = vst [vmem:[#allocation2 + $0x38] sm:$0xf] %v192
    %197 = vrot.lane.b32.xlu0 %v44, 1
    %v198 = vpop.permute.xlu0 %197
    %199 = vrot.lane.b32.xlu0 %v48, 1
    %v200 = vpop.permute.xlu0 %199
    %201 = vrot.lane.b32.xlu0 %v45, 1
    %v202 = vpop.permute.xlu0 %201
    %203 = vrot.lane.b32.xlu0 %v49, 1
    %v204 = vpop.permute.xlu0 %203
    %vm205 = vcmp.lt.s32.totalorder %v61, 1
    %v206 = vsel %vm205, %v202, %v204
    %v207 = vsel %vm205, %v200, %v202
    %v208 = vsel %vm205, %v198, %v200
    %v209 = vsel %vm205, %v204, %v198
    %s210 = scalar_lea.vmem [#allocation4], 3
    %v211 = vld [vmem:[%s210] ss:$8 sm:$0xf]
    %v213 = vlaneseq
    %v214 = vshrl.u32 %v213, 7
    %v215 = vsub.s32 0, %v214
    %v216 = vrot.slane %v211, %v215
    %v217 = vlaneseq
    %v218 = vshrl.u32 %v217, 7
    %v219 = vsub.s32 1, %v218
    %v220 = vrot.slane %v211, %v219
    %v221 = vlaneseq
    %v222 = vshrl.u32 %v221, 7
    %v223 = vsub.s32 2, %v222
    %v224 = vrot.slane %v211, %v223
    %v225 = vlaneseq
    %v226 = vshrl.u32 %v225, 7
    %v227 = vsub.s32 3, %v226
    %v228 = vrot.slane %v211, %v227
    %v233 = vmul.f32 %v209, %v216
    %v234 = vmul.f32 %v208, %v220
    %v235 = vmul.f32 %v207, %v224
    %v236 = vmul.f32 %v206, %v228
    %v241 = vrot.slane %v233, 4
    %v242 = vrot.slane %v234, 4
    %v243 = vrot.slane %v235, 4
    %v244 = vrot.slane %v236, 4
    %249 = vst [vmem:[#allocation2 + $0x20] sm:$0xf0] %v241
    %250 = vst [vmem:[#allocation2 + $0x28] sm:$0xf0] %v242
    %251 = vst [vmem:[#allocation2 + $0x30] sm:$0xf0] %v243
    %252 = vst [vmem:[#allocation2 + $0x38] sm:$0xf0] %v244
    %s253 = scalar_lea.vmem [#allocation4], 4
    %v254 = vld [vmem:[%s253] ss:$8 sm:$0xf]
    %v256 = vlaneseq
    %v257 = vshrl.u32 %v256, 7
    %v258 = vsub.s32 0, %v257
    %v259 = vrot.slane %v254, %v258
    %v260 = vlaneseq
    %v261 = vshrl.u32 %v260, 7
    %v262 = vsub.s32 1, %v261
    %v263 = vrot.slane %v254, %v262
    %v264 = vlaneseq
    %v265 = vshrl.u32 %v264, 7
    %v266 = vsub.s32 2, %v265
    %v267 = vrot.slane %v254, %v266
    %v268 = vlaneseq
    %v269 = vshrl.u32 %v268, 7
    %v270 = vsub.s32 3, %v269
    %v271 = vrot.slane %v254, %v270
    %v272 = vcombine.low %v259, %v263
    %v273 = vcombine.low %v267, %v271
    %v276 = vmul.f32 %v44, %v272
    %v277 = vmul.f32 %v45, %v273
    %v280 = vcombine.high %v276, %v276
    %v281 = vcombine.high %v277, %v277
    %284 = vst [vmem:[#allocation2 + $0x40] sm:$0xf] %v276
    %285 = vst [vmem:[#allocation2 + $0x48] sm:$0xf] %v280
    %286 = vst [vmem:[#allocation2 + $0x50] sm:$0xf] %v277
    %287 = vst [vmem:[#allocation2 + $0x58] sm:$0xf] %v281
    %288 = vrot.lane.b32.xlu0 %v44, 127
    %v289 = vpop.permute.xlu0 %288
    %290 = vrot.lane.b32.xlu0 %v48, 127
    %v291 = vpop.permute.xlu0 %290
    %292 = vrot.lane.b32.xlu0 %v45, 127
    %v293 = vpop.permute.xlu0 %292
    %294 = vrot.lane.b32.xlu0 %v49, 127
    %v295 = vpop.permute.xlu0 %294
    %vm296 = vcmp.lt.s32.totalorder %v61, 127
    %v297 = vsel %vm296, %v293, %v295
    %v298 = vsel %vm296, %v291, %v293
    %v299 = vsel %vm296, %v289, %v291
    %v300 = vsel %vm296, %v295, %v289
    %s301 = scalar_lea.vmem [#allocation4], 5
    %v302 = vld [vmem:[%s301] ss:$8 sm:$0xf]
    %v304 = vlaneseq
    %v305 = vshrl.u32 %v304, 7
    %v306 = vsub.s32 0, %v305
    %v307 = vrot.slane %v302, %v306
    %v308 = vlaneseq
    %v309 = vshrl.u32 %v308, 7
    %v310 = vsub.s32 1, %v309
    %v311 = vrot.slane %v302, %v310
    %v312 = vlaneseq
    %v313 = vshrl.u32 %v312, 7
    %v314 = vsub.s32 2, %v313
    %v315 = vrot.slane %v302, %v314
    %v316 = vlaneseq
    %v317 = vshrl.u32 %v316, 7
    %v318 = vsub.s32 3, %v317
    %v319 = vrot.slane %v302, %v318
    %v324 = vmul.f32 %v299, %v307
    %v325 = vmul.f32 %v298, %v311
    %v326 = vmul.f32 %v297, %v315
    %v327 = vmul.f32 %v300, %v319
    %v332 = vrot.slane %v324, 4
    %v333 = vrot.slane %v325, 4
    %v334 = vrot.slane %v326, 4
    %v335 = vrot.slane %v327, 4
    %340 = vst [vmem:[#allocation2 + $0x40] sm:$0xf0] %v332
    %341 = vst [vmem:[#allocation2 + $0x48] sm:$0xf0] %v333
    %342 = vst [vmem:[#allocation2 + $0x50] sm:$0xf0] %v334
    %343 = vst [vmem:[#allocation2 + $0x58] sm:$0xf0] %v335
    %344 = vrot.lane.b32.xlu0 %v44, 113
    %v345 = vpop.permute.xlu0 %344
    %346 = vrot.lane.b32.xlu0 %v48, 113
    %v347 = vpop.permute.xlu0 %346
    %348 = vrot.lane.b32.xlu0 %v45, 113
    %v349 = vpop.permute.xlu0 %348
    %350 = vrot.lane.b32.xlu0 %v49, 113
    %v351 = vpop.permute.xlu0 %350
    %vm352 = vcmp.lt.s32.totalorder %v61, 113
    %v353 = vsel %vm352, %v349, %v351
    %v354 = vsel %vm352, %v347, %v349
    %v355 = vsel %vm352, %v345, %v347
    %v356 = vsel %vm352, %v351, %v345
    %s357 = scalar_lea.vmem [#allocation4], 6
    %v358 = vld [vmem:[%s357] ss:$8 sm:$0xf]
    %v360 = vlaneseq
    %v361 = vshrl.u32 %v360, 7
    %v362 = vsub.s32 0, %v361
    %v363 = vrot.slane %v358, %v362
    %v364 = vlaneseq
    %v365 = vshrl.u32 %v364, 7
    %v366 = vsub.s32 1, %v365
    %v367 = vrot.slane %v358, %v366
    %v368 = vlaneseq
    %v369 = vshrl.u32 %v368, 7
    %v370 = vsub.s32 2, %v369
    %v371 = vrot.slane %v358, %v370
    %v372 = vlaneseq
    %v373 = vshrl.u32 %v372, 7
    %v374 = vsub.s32 3, %v373
    %v375 = vrot.slane %v358, %v374
    %v380 = vmul.f32 %v355, %v363
    %v381 = vmul.f32 %v354, %v367
    %v382 = vmul.f32 %v353, %v371
    %v383 = vmul.f32 %v356, %v375
    %384 = vst [vmem:[#allocation2 + $0x60] sm:$0xf] %v380
    %385 = vst [vmem:[#allocation2 + $0x68] sm:$0xf] %v381
    %386 = vst [vmem:[#allocation2 + $0x70] sm:$0xf] %v382
    %387 = vst [vmem:[#allocation2 + $0x78] sm:$0xf] %v383
    %388 = vrot.lane.b32.xlu0 %v44, 112
    %v389 = vpop.permute.xlu0 %388
    %390 = vrot.lane.b32.xlu0 %v48, 112
    %v391 = vpop.permute.xlu0 %390
    %392 = vrot.lane.b32.xlu0 %v45, 112
    %v393 = vpop.permute.xlu0 %392
    %394 = vrot.lane.b32.xlu0 %v49, 112
    %v395 = vpop.permute.xlu0 %394
    %vm396 = vcmp.lt.s32.totalorder %v61, 112
    %v397 = vsel %vm396, %v393, %v395
    %v398 = vsel %vm396, %v391, %v393
    %v399 = vsel %vm396, %v389, %v391
    %v400 = vsel %vm396, %v395, %v389
    %s401 = scalar_lea.vmem [#allocation4], 7
    %v402 = vld [vmem:[%s401] ss:$8 sm:$0xf]
    %v404 = vlaneseq
    %v405 = vshrl.u32 %v404, 7
    %v406 = vsub.s32 0, %v405
    %v407 = vrot.slane %v402, %v406
    %v408 = vlaneseq
    %v409 = vshrl.u32 %v408, 7
    %v410 = vsub.s32 1, %v409
    %v411 = vrot.slane %v402, %v410
    %v412 = vlaneseq
    %v413 = vshrl.u32 %v412, 7
    %v414 = vsub.s32 2, %v413
    %v415 = vrot.slane %v402, %v414
    %v416 = vlaneseq
    %v417 = vshrl.u32 %v416, 7
    %v418 = vsub.s32 3, %v417
    %v419 = vrot.slane %v402, %v418
    %v424 = vmul.f32 %v399, %v407
    %v425 = vmul.f32 %v398, %v411
    %v426 = vmul.f32 %v397, %v415
    %v427 = vmul.f32 %v400, %v419
    %v432 = vrot.slane %v424, 4
    %v433 = vrot.slane %v425, 4
    %v434 = vrot.slane %v426, 4
    %v435 = vrot.slane %v427, 4
    %440 = vst [vmem:[#allocation2 + $0x60] sm:$0xf0] %v432
    %441 = vst [vmem:[#allocation2 + $0x68] sm:$0xf0] %v433
    %442 = vst [vmem:[#allocation2 + $0x70] sm:$0xf0] %v434
    %443 = vst [vmem:[#allocation2 + $0x78] sm:$0xf0] %v435
    %444 = vrot.lane.b32.xlu0 %v44, 111
    %v445 = vpop.permute.xlu0 %444
    %446 = vrot.lane.b32.xlu0 %v48, 111
    %v447 = vpop.permute.xlu0 %446
    %448 = vrot.lane.b32.xlu0 %v45, 111
    %v449 = vpop.permute.xlu0 %448
    %450 = vrot.lane.b32.xlu0 %v49, 111
    %v451 = vpop.permute.xlu0 %450
    %vm452 = vcmp.lt.s32.totalorder %v61, 111
    %v453 = vsel %vm452, %v449, %v451
    %v454 = vsel %vm452, %v447, %v449
    %v455 = vsel %vm452, %v445, %v447
    %v456 = vsel %vm452, %v451, %v445
    %s457 = scalar_lea.vmem [#allocation4], 32
    %v458 = vld [vmem:[%s457] ss:$8 sm:$0xf]
    %v460 = vlaneseq
    %v461 = vshrl.u32 %v460, 7
    %v462 = vsub.s32 0, %v461
    %v463 = vrot.slane %v458, %v462
    %v464 = vlaneseq
    %v465 = vshrl.u32 %v464, 7
    %v466 = vsub.s32 1, %v465
    %v467 = vrot.slane %v458, %v466
    %v468 = vlaneseq
    %v469 = vshrl.u32 %v468, 7
    %v470 = vsub.s32 2, %v469
    %v471 = vrot.slane %v458, %v470
    %v472 = vlaneseq
    %v473 = vshrl.u32 %v472, 7
    %v474 = vsub.s32 3, %v473
    %v475 = vrot.slane %v458, %v474
    %v480 = vmul.f32 %v455, %v463
    %v481 = vmul.f32 %v454, %v467
    %v482 = vmul.f32 %v453, %v471
    %v483 = vmul.f32 %v456, %v475
    %484 = vst [vmem:[#allocation2 + $0x80] sm:$0xf] %v480
    %485 = vst [vmem:[#allocation2 + $0x88] sm:$0xf] %v481
    %486 = vst [vmem:[#allocation2 + $0x90] sm:$0xf] %v482
    %487 = vst [vmem:[#allocation2 + $0x98] sm:$0xf] %v483
    %v488 = vld [vmem:[%s2] sm:$0xff]
    %v489 = vld [vmem:[#allocation2] sm:$0xff]
    %v490 = vld [vmem:[#allocation2 + $0x8] sm:$0xff]
    %v491 = vld [vmem:[#allocation2 + $0x10] sm:$0xff]
    %v492 = vld [vmem:[#allocation2 + $0x18] sm:$0xff]
    %v493 = vld [vmem:[#allocation2 + $0x20] sm:$0xff]
    %v494 = vld [vmem:[#allocation2 + $0x28] sm:$0xff]
    %v495 = vld [vmem:[#allocation2 + $0x30] sm:$0xff]
    %v496 = vld [vmem:[#allocation2 + $0x38] sm:$0xff]
    %v497 = vld [vmem:[#allocation2 + $0x40] sm:$0xff]
    %v498 = vld [vmem:[#allocation2 + $0x48] sm:$0xff]
    %v499 = vld [vmem:[#allocation2 + $0x50] sm:$0xff]
    %v500 = vld [vmem:[#allocation2 + $0x58] sm:$0xff]
    %v501 = vld [vmem:[#allocation2 + $0x60] sm:$0xff]
    %v502 = vld [vmem:[#allocation2 + $0x68] sm:$0xff]
    %v503 = vld [vmem:[#allocation2 + $0x70] sm:$0xff]
    %v504 = vld [vmem:[#allocation2 + $0x78] sm:$0xff]
    %v505 = vld [vmem:[#allocation2 + $0x80] sm:$0xf]
    %v506 = vld [vmem:[#allocation2 + $0x88] sm:$0xf]
    %v507 = vld [vmem:[#allocation2 + $0x90] sm:$0xf]
    %v508 = vld [vmem:[#allocation2 + $0x98] sm:$0xf]
    %vm509 = vcmask 293888
    %v511 = vsel %vm509, %v488, 0
    %vm513 = vcmask 1043456
    %v515 = vsel %vm513, %v505, 0
    %v518 = vsel %vm513, %v506, 0
    %v521 = vsel %vm513, %v507, 0
    %v524 = vsel %vm513, %v508, 0
    %526 = vmatprep.subr.mxu0 0.0
    %527 = vmatpush1.msra.mxu0 0.0
    %528 = vmatprep.subr.mxu0 0.0
    %529 = vmatpush1.msra.mxu0 0.0
    %530 = vmatprep.subr.mxu0 0.0
    %531 = vmatpush1.msra.mxu0 0.0
    %532 = vmatprep.subr.mxu0 0.0
    %533 = vmatpush1.msra.mxu0 0.0
    %534 = vmatprep.subr.mxu0 0.0
    %535 = vmatpush1.msra.mxu0 0.0
    %536 = vmatprep.subr.mxu0 0.0
    %537 = vmatpush1.msra.mxu0 0.0
    %538 = vmatprep.subr.mxu0 0.0
    %539 = vmatpush1.msra.mxu0 0.0
    %540 = vmatprep.subr.mxu0 0.0
    %541 = vmatpush1.msra.mxu0 0.0
    %542 = vmatprep.subr.mxu0 0.0
    %543 = vmatpush1.msra.mxu0 0.0
    %544 = vmatprep.subr.mxu0 0.0
    %545 = vmatpush1.msra.mxu0 0.0
    %546 = vmatprep.subr.mxu0 0.0
    %547 = vmatpush1.msra.mxu0 0.0
    %548 = vmatprep.subr.mxu0 %v518
    %549 = vmatpush1.msra.mxu0 %v515
    %550 = vmatprep.subr.mxu0 %v502
    %551 = vmatpush1.msra.mxu0 %v501
    %552 = vmatprep.subr.mxu0 %v498
    %553 = vmatpush1.msra.mxu0 %v497
    %554 = vmatprep.subr.mxu0 %v494
    %555 = vmatpush1.msra.mxu0 %v493
    %556 = vmatprep.subr.mxu0 %v490
    %557 = vmatpush1.msra.mxu0 %v489
    %558 = vmatprep.subr.mxu0 0.0
    %559 = vmatpush2.msra.mxu0 0.0
    %560 = vmatprep.subr.mxu0 0.0
    %561 = vmatpush2.msra.mxu0 0.0
    %562 = vmatprep.subr.mxu0 0.0
    %563 = vmatpush2.msra.mxu0 0.0
    %564 = vmatprep.subr.mxu0 0.0
    %565 = vmatpush2.msra.mxu0 0.0
    %566 = vmatprep.subr.mxu0 0.0
    %567 = vmatpush2.msra.mxu0 0.0
    %568 = vmatprep.subr.mxu0 0.0
    %569 = vmatpush2.msra.mxu0 0.0
    %570 = vmatprep.subr.mxu0 0.0
    %571 = vmatpush2.msra.mxu0 0.0
    %572 = vmatprep.subr.mxu0 0.0
    %573 = vmatpush2.msra.mxu0 0.0
    %574 = vmatprep.subr.mxu0 0.0
    %575 = vmatpush2.msra.mxu0 0.0
    %576 = vmatprep.subr.mxu0 0.0
    %577 = vmatpush2.msra.mxu0 0.0
    %578 = vmatprep.subr.mxu0 0.0
    %579 = vmatpush2.msra.mxu0 0.0
    %580 = vmatprep.subr.mxu0 0.0
    %581 = vmatpush2.msra.mxu0 0.0
    %582 = vmatprep.subr.mxu0 0.0
    %583 = vmatpush2.msra.mxu0 0.0
    %584 = vmatprep.subr.mxu0 0.0
    %585 = vmatpush2.msra.mxu0 0.0
    %586 = vmatprep.subr.mxu0 0.0
    %587 = vmatpush2.msra.mxu0 0.0
    %588 = vmatprep.subr.mxu0 0.0
    %589 = vmatpush2.msra.mxu0 0.0
    %590 = vmatprep.mubr.f32.mxu0 0.0
    %591 = vmatmul.mubr.f32.gmra.mxu0 %v511
    %v592 = vpop.f32.mrf.mxu0
    %v593 = vadd.f32 0.0, %v592
    %v594 = vpop.f32.mrf.mxu0
    %v595 = vadd.f32 0.0, %v594
    %596 = vdwg.mxu0
    %597 = vmatprep.subr.mxu0 0.0
    %598 = vmatpush1.msra.mxu0 0.0
    %599 = vmatprep.subr.mxu0 0.0
    %600 = vmatpush1.msra.mxu0 0.0
    %601 = vmatprep.subr.mxu0 0.0
    %602 = vmatpush1.msra.mxu0 0.0
    %603 = vmatprep.subr.mxu0 0.0
    %604 = vmatpush1.msra.mxu0 0.0
    %605 = vmatprep.subr.mxu0 0.0
    %606 = vmatpush1.msra.mxu0 0.0
    %607 = vmatprep.subr.mxu0 0.0
    %608 = vmatpush1.msra.mxu0 0.0
    %609 = vmatprep.subr.mxu0 0.0
    %610 = vmatpush1.msra.mxu0 0.0
    %611 = vmatprep.subr.mxu0 0.0
    %612 = vmatpush1.msra.mxu0 0.0
    %613 = vmatprep.subr.mxu0 0.0
    %614 = vmatpush1.msra.mxu0 0.0
    %615 = vmatprep.subr.mxu0 0.0
    %616 = vmatpush1.msra.mxu0 0.0
    %617 = vmatprep.subr.mxu0 0.0
    %618 = vmatpush1.msra.mxu0 0.0
    %619 = vmatprep.subr.mxu0 %v524
    %620 = vmatpush1.msra.mxu0 %v521
    %621 = vmatprep.subr.mxu0 %v504
    %622 = vmatpush1.msra.mxu0 %v503
    %623 = vmatprep.subr.mxu0 %v500
    %624 = vmatpush1.msra.mxu0 %v499
    %625 = vmatprep.subr.mxu0 %v496
    %626 = vmatpush1.msra.mxu0 %v495
    %627 = vmatprep.subr.mxu0 %v492
    %628 = vmatpush1.msra.mxu0 %v491
    %629 = vmatprep.subr.mxu0 0.0
    %630 = vmatpush2.msra.mxu0 0.0
    %631 = vmatprep.subr.mxu0 0.0
    %632 = vmatpush2.msra.mxu0 0.0
    %633 = vmatprep.subr.mxu0 0.0
    %634 = vmatpush2.msra.mxu0 0.0
    %635 = vmatprep.subr.mxu0 0.0
    %636 = vmatpush2.msra.mxu0 0.0
    %637 = vmatprep.subr.mxu0 0.0
    %638 = vmatpush2.msra.mxu0 0.0
    %639 = vmatprep.subr.mxu0 0.0
    %640 = vmatpush2.msra.mxu0 0.0
    %641 = vmatprep.subr.mxu0 0.0
    %642 = vmatpush2.msra.mxu0 0.0
    %643 = vmatprep.subr.mxu0 0.0
    %644 = vmatpush2.msra.mxu0 0.0
    %645 = vmatprep.subr.mxu0 0.0
    %646 = vmatpush2.msra.mxu0 0.0
    %647 = vmatprep.subr.mxu0 0.0
    %648 = vmatpush2.msra.mxu0 0.0
    %649 = vmatprep.subr.mxu0 0.0
    %650 = vmatpush2.msra.mxu0 0.0
    %651 = vmatprep.subr.mxu0 0.0
    %652 = vmatpush2.msra.mxu0 0.0
    %653 = vmatprep.subr.mxu0 0.0
    %654 = vmatpush2.msra.mxu0 0.0
    %655 = vmatprep.subr.mxu0 0.0
    %656 = vmatpush2.msra.mxu0 0.0
    %657 = vmatprep.subr.mxu0 0.0
    %658 = vmatpush2.msra.mxu0 0.0
    %659 = vmatprep.subr.mxu0 0.0
    %660 = vmatpush2.msra.mxu0 0.0
    %661 = vmatprep.mubr.f32.mxu0 0.0
    %662 = vmatmul.mubr.f32.gmra.mxu0 %v511
    %v663 = vpop.f32.mrf.mxu0
    %v664 = vadd.f32 0.0, %v663
    %v665 = vpop.f32.mrf.mxu0
    %v666 = vadd.f32 0.0, %v665
    %667 = vdwg.mxu0
    %v668 = vadd.f32 %v593, %v595
    %v669 = vadd.f32 %v668, %v664
    %v670 = vadd.f32 %v669, %v666
    %671 = vadd.xlane.f32.xlu0 %v670
    %v672 = vpop.xlane.xlu0 %671
    %v673 = vrcp.pop 512.0
    %v674 = vmul.f32 %v672, %v673
    %v675 = vmul.f32 %v593, %v593
    %v676 = vmul.f32 %v595, %v595
    %v677 = vmul.f32 %v664, %v664
    %v678 = vmul.f32 %v666, %v666
    %v679 = vadd.f32 %v675, %v676
    %v680 = vadd.f32 %v679, %v677
    %v681 = vadd.f32 %v680, %v678
    %682 = vadd.xlane.f32.xlu0 %v681
    %v683 = vpop.xlane.xlu0 %682
    %v684 = vmul.f32 %v683, %v673
    %v685 = vmul.f32 %v674, %v674
    %v686 = vsub.f32 %v684, %v685
    %v687 = vld [vmem:[%s3] sm:$0xff]
    %v688 = vadd.f32 %v686, 1e-05
    %v689 = vrsqrt.pop %v688
    %v690 = vmul.f32 %v687, %v689
    %v691 = vld [vmem:[%s4] sm:$0xff]
    %v692 = vmul.f32 %v674, %v690
    %v693 = vsub.f32 %v691, %v692
    %695 = vset.pattern.permute.xlu0 0
    %696 = vperm.xlu0 %695, %v690
    %v697 = vpop.permute.xlu0 %696
    %v699 = vmul.f32 %v593, %v697
    %v700 = vmul.f32 %v595, %v697
    %v701 = vmul.f32 %v664, %v697
    %v702 = vmul.f32 %v666, %v697
    %704 = vset.pattern.permute.xlu0 0
    %705 = vperm.xlu0 %704, %v693
    %v706 = vpop.permute.xlu0 %705
    %v708 = vadd.f32 %v699, %v706
    %v709 = vadd.f32 %v700, %v706
    %v710 = vadd.f32 %v701, %v706
    %v711 = vadd.f32 %v702, %v706
    %v712 = vmax.f32 %v708, 0.0
    %v713 = vmax.f32 %v709, 0.0
    %v714 = vmax.f32 %v710, 0.0
    %v715 = vmax.f32 %v711, 0.0
    %716 = vrot.lane.b32.xlu0 %v712, 17
    %v717 = vpop.permute.xlu0 %716
    %718 = vrot.lane.b32.xlu0 %v713, 17
    %v719 = vpop.permute.xlu0 %718
    %720 = vrot.lane.b32.xlu0 %v714, 17
    %v721 = vpop.permute.xlu0 %720
    %722 = vrot.lane.b32.xlu0 %v715, 17
    %v723 = vpop.permute.xlu0 %722
    %v724 = vsel %vm62, %v721, %v723
    %v725 = vsel %vm62, %v719, %v721
    %v726 = vsel %vm62, %v717, %v719
    %v727 = vsel %vm62, %v723, %v717
    %v728 = vld [vmem:[#allocation4] ss:$8 sm:$0xf]
    %v730 = vlaneseq
    %v731 = vshrl.u32 %v730, 7
    %v732 = vsub.s32 0, %v731
    %v733 = vrot.slane %v728, %v732
    %v734 = vlaneseq
    %v735 = vshrl.u32 %v734, 7
    %v736 = vsub.s32 1, %v735
    %v737 = vrot.slane %v728, %v736
    %v738 = vlaneseq
    %v739 = vshrl.u32 %v738, 7
    %v740 = vsub.s32 2, %v739
    %v741 = vrot.slane %v728, %v740
    %v742 = vlaneseq
    %v743 = vshrl.u32 %v742, 7
    %v744 = vsub.s32 3, %v743
    %v745 = vrot.slane %v728, %v744
    %v750 = vmul.f32 %v727, %v733
    %v751 = vmul.f32 %v726, %v737
    %v752 = vmul.f32 %v725, %v741
    %v753 = vmul.f32 %v724, %v745
    %754 = vst [vmem:[#allocation3] sm:$0xff] %v750
    %755 = vst [vmem:[#allocation3 + $0x8] sm:$0xff] %v751
    %756 = vst [vmem:[#allocation3 + $0x10] sm:$0xff] %v752
    %757 = vst [vmem:[#allocation3 + $0x18] sm:$0xff] %v753
    %758 = vrot.lane.b32.xlu0 %v712, 16
    %v759 = vpop.permute.xlu0 %758
    %760 = vrot.lane.b32.xlu0 %v713, 16
    %v761 = vpop.permute.xlu0 %760
    %762 = vrot.lane.b32.xlu0 %v714, 16
    %v763 = vpop.permute.xlu0 %762
    %764 = vrot.lane.b32.xlu0 %v715, 16
    %v765 = vpop.permute.xlu0 %764
    %v766 = vsel %vm105, %v763, %v765
    %v767 = vsel %vm105, %v761, %v763
    %v768 = vsel %vm105, %v759, %v761
    %v769 = vsel %vm105, %v765, %v759
    %v770 = vld [vmem:[%s110] ss:$8 sm:$0xf]
    %v772 = vlaneseq
    %v773 = vshrl.u32 %v772, 7
    %v774 = vsub.s32 0, %v773
    %v775 = vrot.slane %v770, %v774
    %v776 = vlaneseq
    %v777 = vshrl.u32 %v776, 7
    %v778 = vsub.s32 1, %v777
    %v779 = vrot.slane %v770, %v778
    %v780 = vlaneseq
    %v781 = vshrl.u32 %v780, 7
    %v782 = vsub.s32 2, %v781
    %v783 = vrot.slane %v770, %v782
    %v784 = vlaneseq
    %v785 = vshrl.u32 %v784, 7
    %v786 = vsub.s32 3, %v785
    %v787 = vrot.slane %v770, %v786
    %v792 = vmul.f32 %v769, %v775
    %v793 = vmul.f32 %v768, %v779
    %v794 = vmul.f32 %v767, %v783
    %v795 = vmul.f32 %v766, %v787
    %796 = vst [vmem:[#allocation3 + $0x20] sm:$0xff] %v792
    %797 = vst [vmem:[#allocation3 + $0x28] sm:$0xff] %v793
    %798 = vst [vmem:[#allocation3 + $0x30] sm:$0xff] %v794
    %799 = vst [vmem:[#allocation3 + $0x38] sm:$0xff] %v795
    %800 = vrot.lane.b32.xlu0 %v712, 15
    %v801 = vpop.permute.xlu0 %800
    %802 = vrot.lane.b32.xlu0 %v713, 15
    %v803 = vpop.permute.xlu0 %802
    %804 = vrot.lane.b32.xlu0 %v714, 15
    %v805 = vpop.permute.xlu0 %804
    %806 = vrot.lane.b32.xlu0 %v715, 15
    %v807 = vpop.permute.xlu0 %806
    %v808 = vsel %vm161, %v805, %v807
    %v809 = vsel %vm161, %v803, %v805
    %v810 = vsel %vm161, %v801, %v803
    %v811 = vsel %vm161, %v807, %v801
    %v812 = vld [vmem:[%s166] ss:$8 sm:$0xf]
    %v814 = vlaneseq
    %v815 = vshrl.u32 %v814, 7
    %v816 = vsub.s32 0, %v815
    %v817 = vrot.slane %v812, %v816
    %v818 = vlaneseq
    %v819 = vshrl.u32 %v818, 7
    %v820 = vsub.s32 1, %v819
    %v821 = vrot.slane %v812, %v820
    %v822 = vlaneseq
    %v823 = vshrl.u32 %v822, 7
    %v824 = vsub.s32 2, %v823
    %v825 = vrot.slane %v812, %v824
    %v826 = vlaneseq
    %v827 = vshrl.u32 %v826, 7
    %v828 = vsub.s32 3, %v827
    %v829 = vrot.slane %v812, %v828
    %v834 = vmul.f32 %v811, %v817
    %v835 = vmul.f32 %v810, %v821
    %v836 = vmul.f32 %v809, %v825
    %v837 = vmul.f32 %v808, %v829
    %838 = vst [vmem:[#allocation3 + $0x40] sm:$0xff] %v834
    %839 = vst [vmem:[#allocation3 + $0x48] sm:$0xff] %v835
    %840 = vst [vmem:[#allocation3 + $0x50] sm:$0xff] %v836
    %841 = vst [vmem:[#allocation3 + $0x58] sm:$0xff] %v837
    %842 = vrot.lane.b32.xlu0 %v712, 1
    %v843 = vpop.permute.xlu0 %842
    %844 = vrot.lane.b32.xlu0 %v713, 1
    %v845 = vpop.permute.xlu0 %844
    %846 = vrot.lane.b32.xlu0 %v714, 1
    %v847 = vpop.permute.xlu0 %846
    %848 = vrot.lane.b32.xlu0 %v715, 1
    %v849 = vpop.permute.xlu0 %848
    %v850 = vsel %vm205, %v847, %v849
    %v851 = vsel %vm205, %v845, %v847
    %v852 = vsel %vm205, %v843, %v845
    %v853 = vsel %vm205, %v849, %v843
    %v854 = vld [vmem:[%s210] ss:$8 sm:$0xf]
    %v856 = vlaneseq
    %v857 = vshrl.u32 %v856, 7
    %v858 = vsub.s32 0, %v857
    %v859 = vrot.slane %v854, %v858
    %v860 = vlaneseq
    %v861 = vshrl.u32 %v860, 7
    %v862 = vsub.s32 1, %v861
    %v863 = vrot.slane %v854, %v862
    %v864 = vlaneseq
    %v865 = vshrl.u32 %v864, 7
    %v866 = vsub.s32 2, %v865
    %v867 = vrot.slane %v854, %v866
    %v868 = vlaneseq
    %v869 = vshrl.u32 %v868, 7
    %v870 = vsub.s32 3, %v869
    %v871 = vrot.slane %v854, %v870
    %v876 = vmul.f32 %v853, %v859
    %v877 = vmul.f32 %v852, %v863
    %v878 = vmul.f32 %v851, %v867
    %v879 = vmul.f32 %v850, %v871
    %880 = vst [vmem:[#allocation3 + $0x60] sm:$0xff] %v876
    %881 = vst [vmem:[#allocation3 + $0x68] sm:$0xff] %v877
    %882 = vst [vmem:[#allocation3 + $0x70] sm:$0xff] %v878
    %883 = vst [vmem:[#allocation3 + $0x78] sm:$0xff] %v879
    %v884 = vld [vmem:[%s253] ss:$8 sm:$0xf]
    %v886 = vlaneseq
    %v887 = vshrl.u32 %v886, 7
    %v888 = vsub.s32 0, %v887
    %v889 = vrot.slane %v884, %v888
    %v890 = vlaneseq
    %v891 = vshrl.u32 %v890, 7
    %v892 = vsub.s32 1, %v891
    %v893 = vrot.slane %v884, %v892
    %v894 = vlaneseq
    %v895 = vshrl.u32 %v894, 7
    %v896 = vsub.s32 2, %v895
    %v897 = vrot.slane %v884, %v896
    %v898 = vlaneseq
    %v899 = vshrl.u32 %v898, 7
    %v900 = vsub.s32 3, %v899
    %v901 = vrot.slane %v884, %v900
    %v906 = vmul.f32 %v712, %v889
    %v907 = vmul.f32 %v713, %v893
    %v908 = vmul.f32 %v714, %v897
    %v909 = vmul.f32 %v715, %v901
    %910 = vst [vmem:[#allocation3 + $0x80] sm:$0xff] %v906
    %911 = vst [vmem:[#allocation3 + $0x88] sm:$0xff] %v907
    %912 = vst [vmem:[#allocation3 + $0x90] sm:$0xff] %v908
    %913 = vst [vmem:[#allocation3 + $0x98] sm:$0xff] %v909
    %914 = vrot.lane.b32.xlu0 %v712, 127
    %v915 = vpop.permute.xlu0 %914
    %916 = vrot.lane.b32.xlu0 %v713, 127
    %v917 = vpop.permute.xlu0 %916
    %918 = vrot.lane.b32.xlu0 %v714, 127
    %v919 = vpop.permute.xlu0 %918
    %920 = vrot.lane.b32.xlu0 %v715, 127
    %v921 = vpop.permute.xlu0 %920
    %v922 = vsel %vm296, %v919, %v921
    %v923 = vsel %vm296, %v917, %v919
    %v924 = vsel %vm296, %v915, %v917
    %v925 = vsel %vm296, %v921, %v915
    %v926 = vld [vmem:[%s301] ss:$8 sm:$0xf]
    %v928 = vlaneseq
    %v929 = vshrl.u32 %v928, 7
    %v930 = vsub.s32 0, %v929
    %v931 = vrot.slane %v926, %v930
    %v932 = vlaneseq
    %v933 = vshrl.u32 %v932, 7
    %v934 = vsub.s32 1, %v933
    %v935 = vrot.slane %v926, %v934
    %v936 = vlaneseq
    %v937 = vshrl.u32 %v936, 7
    %v938 = vsub.s32 2, %v937
    %v939 = vrot.slane %v926, %v938
    %v940 = vlaneseq
    %v941 = vshrl.u32 %v940, 7
    %v942 = vsub.s32 3, %v941
    %v943 = vrot.slane %v926, %v942
    %v948 = vmul.f32 %v924, %v931
    %v949 = vmul.f32 %v923, %v935
    %v950 = vmul.f32 %v922, %v939
    %v951 = vmul.f32 %v925, %v943
    %952 = vst [vmem:[#allocation3 + $0xa0] sm:$0xff] %v948
    %953 = vst [vmem:[#allocation3 + $0xa8] sm:$0xff] %v949
    %954 = vst [vmem:[#allocation3 + $0xb0] sm:$0xff] %v950
    %955 = vst [vmem:[#allocation3 + $0xb8] sm:$0xff] %v951
    %956 = vrot.lane.b32.xlu0 %v712, 113
    %v957 = vpop.permute.xlu0 %956
    %958 = vrot.lane.b32.xlu0 %v713, 113
    %v959 = vpop.permute.xlu0 %958
    %960 = vrot.lane.b32.xlu0 %v714, 113
    %v961 = vpop.permute.xlu0 %960
    %962 = vrot.lane.b32.xlu0 %v715, 113
    %v963 = vpop.permute.xlu0 %962
    %v964 = vsel %vm352, %v961, %v963
    %v965 = vsel %vm352, %v959, %v961
    %v966 = vsel %vm352, %v957, %v959
    %v967 = vsel %vm352, %v963, %v957
    %v968 = vld [vmem:[%s357] ss:$8 sm:$0xf]
    %v970 = vlaneseq
    %v971 = vshrl.u32 %v970, 7
    %v972 = vsub.s32 0, %v971
    %v973 = vrot.slane %v968, %v972
    %v974 = vlaneseq
    %v975 = vshrl.u32 %v974, 7
    %v976 = vsub.s32 1, %v975
    %v977 = vrot.slane %v968, %v976
    %v978 = vlaneseq
    %v979 = vshrl.u32 %v978, 7
    %v980 = vsub.s32 2, %v979
    %v981 = vrot.slane %v968, %v980
    %v982 = vlaneseq
    %v983 = vshrl.u32 %v982, 7
    %v984 = vsub.s32 3, %v983
    %v985 = vrot.slane %v968, %v984
    %v990 = vmul.f32 %v966, %v973
    %v991 = vmul.f32 %v965, %v977
    %v992 = vmul.f32 %v964, %v981
    %v993 = vmul.f32 %v967, %v985
    %994 = vst [vmem:[#allocation3 + $0xc0] sm:$0xff] %v990
    %995 = vst [vmem:[#allocation3 + $0xc8] sm:$0xff] %v991
    %996 = vst [vmem:[#allocation3 + $0xd0] sm:$0xff] %v992
    %997 = vst [vmem:[#allocation3 + $0xd8] sm:$0xff] %v993
    %998 = vrot.lane.b32.xlu0 %v712, 112
    %v999 = vpop.permute.xlu0 %998
    %1000 = vrot.lane.b32.xlu0 %v713, 112
    %v1001 = vpop.permute.xlu0 %1000
    %1002 = vrot.lane.b32.xlu0 %v714, 112
    %v1003 = vpop.permute.xlu0 %1002
    %1004 = vrot.lane.b32.xlu0 %v715, 112
    %v1005 = vpop.permute.xlu0 %1004
    %v1006 = vsel %vm396, %v1003, %v1005
    %v1007 = vsel %vm396, %v1001, %v1003
    %v1008 = vsel %vm396, %v999, %v1001
    %v1009 = vsel %vm396, %v1005, %v999
    %v1010 = vld [vmem:[%s401] ss:$8 sm:$0xf]
    %v1012 = vlaneseq
    %v1013 = vshrl.u32 %v1012, 7
    %v1014 = vsub.s32 0, %v1013
    %v1015 = vrot.slane %v1010, %v1014
    %v1016 = vlaneseq
    %v1017 = vshrl.u32 %v1016, 7
    %v1018 = vsub.s32 1, %v1017
    %v1019 = vrot.slane %v1010, %v1018
    %v1020 = vlaneseq
    %v1021 = vshrl.u32 %v1020, 7
    %v1022 = vsub.s32 2, %v1021
    %v1023 = vrot.slane %v1010, %v1022
    %v1024 = vlaneseq
    %v1025 = vshrl.u32 %v1024, 7
    %v1026 = vsub.s32 3, %v1025
    %v1027 = vrot.slane %v1010, %v1026
    %v1032 = vmul.f32 %v1008, %v1015
    %v1033 = vmul.f32 %v1007, %v1019
    %v1034 = vmul.f32 %v1006, %v1023
    %v1035 = vmul.f32 %v1009, %v1027
    %1036 = vst [vmem:[#allocation3 + $0xe0] sm:$0xff] %v1032
    %1037 = vst [vmem:[#allocation3 + $0xe8] sm:$0xff] %v1033
    %1038 = vst [vmem:[#allocation3 + $0xf0] sm:$0xff] %v1034
    %1039 = vst [vmem:[#allocation3 + $0xf8] sm:$0xff] %v1035
    %1040 = vrot.lane.b32.xlu0 %v712, 111
    %v1041 = vpop.permute.xlu0 %1040
    %1042 = vrot.lane.b32.xlu0 %v713, 111
    %v1043 = vpop.permute.xlu0 %1042
    %1044 = vrot.lane.b32.xlu0 %v714, 111
    %v1045 = vpop.permute.xlu0 %1044
    %1046 = vrot.lane.b32.xlu0 %v715, 111
    %v1047 = vpop.permute.xlu0 %1046
    %v1048 = vsel %vm452, %v1045, %v1047
    %v1049 = vsel %vm452, %v1043, %v1045
    %v1050 = vsel %vm452, %v1041, %v1043
    %v1051 = vsel %vm452, %v1047, %v1041
    %v1052 = vld [vmem:[%s457] ss:$8 sm:$0xf]
    %v1054 = vlaneseq
    %v1055 = vshrl.u32 %v1054, 7
    %v1056 = vsub.s32 0, %v1055
    %v1057 = vrot.slane %v1052, %v1056
    %v1058 = vlaneseq
    %v1059 = vshrl.u32 %v1058, 7
    %v1060 = vsub.s32 1, %v1059
    %v1061 = vrot.slane %v1052, %v1060
    %v1062 = vlaneseq
    %v1063 = vshrl.u32 %v1062, 7
    %v1064 = vsub.s32 2, %v1063
    %v1065 = vrot.slane %v1052, %v1064
    %v1066 = vlaneseq
    %v1067 = vshrl.u32 %v1066, 7
    %v1068 = vsub.s32 3, %v1067
    %v1069 = vrot.slane %v1052, %v1068
    %v1074 = vmul.f32 %v1050, %v1057
    %v1075 = vmul.f32 %v1049, %v1061
    %v1076 = vmul.f32 %v1048, %v1065
    %v1077 = vmul.f32 %v1051, %v1069
    %1078 = vst [vmem:[#allocation3 + $0x100] sm:$0xff] %v1074
    %1079 = vst [vmem:[#allocation3 + $0x108] sm:$0xff] %v1075
    %1080 = vst [vmem:[#allocation3 + $0x110] sm:$0xff] %v1076
    %1081 = vst [vmem:[#allocation3 + $0x118] sm:$0xff] %v1077
    %v1082 = vld [vmem:[%s5] sm:$0xff]
    %v1083 = vld [vmem:[#allocation3] sm:$0xff]
    %v1084 = vld [vmem:[#allocation3 + $0x8] sm:$0xff]
    %v1085 = vld [vmem:[#allocation3 + $0x10] sm:$0xff]
    %v1086 = vld [vmem:[#allocation3 + $0x18] sm:$0xff]
    %v1087 = vld [vmem:[#allocation3 + $0x20] sm:$0xff]
    %v1088 = vld [vmem:[#allocation3 + $0x28] sm:$0xff]
    %v1089 = vld [vmem:[#allocation3 + $0x30] sm:$0xff]
    %v1090 = vld [vmem:[#allocation3 + $0x38] sm:$0xff]
    %v1091 = vld [vmem:[#allocation3 + $0x40] sm:$0xff]
    %v1092 = vld [vmem:[#allocation3 + $0x48] sm:$0xff]
    %v1093 = vld [vmem:[#allocation3 + $0x50] sm:$0xff]
    %v1094 = vld [vmem:[#allocation3 + $0x58] sm:$0xff]
    %v1095 = vld [vmem:[#allocation3 + $0x60] sm:$0xff]
    %v1096 = vld [vmem:[#allocation3 + $0x68] sm:$0xff]
    %v1097 = vld [vmem:[#allocation3 + $0x70] sm:$0xff]
    %v1098 = vld [vmem:[#allocation3 + $0x78] sm:$0xff]
    %v1099 = vld [vmem:[#allocation3 + $0x80] sm:$0xff]
    %v1100 = vld [vmem:[#allocation3 + $0x88] sm:$0xff]
    %v1101 = vld [vmem:[#allocation3 + $0x90] sm:$0xff]
    %v1102 = vld [vmem:[#allocation3 + $0x98] sm:$0xff]
    %v1103 = vld [vmem:[#allocation3 + $0xa0] sm:$0xff]
    %v1104 = vld [vmem:[#allocation3 + $0xa8] sm:$0xff]
    %v1105 = vld [vmem:[#allocation3 + $0xb0] sm:$0xff]
    %v1106 = vld [vmem:[#allocation3 + $0xb8] sm:$0xff]
    %v1107 = vld [vmem:[#allocation3 + $0xc0] sm:$0xff]
    %v1108 = vld [vmem:[#allocation3 + $0xc8] sm:$0xff]
    %v1109 = vld [vmem:[#allocation3 + $0xd0] sm:$0xff]
    %v1110 = vld [vmem:[#allocation3 + $0xd8] sm:$0xff]
    %v1111 = vld [vmem:[#allocation3 + $0xe0] sm:$0xff]
    %v1112 = vld [vmem:[#allocation3 + $0xe8] sm:$0xff]
    %v1113 = vld [vmem:[#allocation3 + $0xf0] sm:$0xff]
    %v1114 = vld [vmem:[#allocation3 + $0xf8] sm:$0xff]
    %v1115 = vld [vmem:[#allocation3 + $0x100] sm:$0xff]
    %v1116 = vld [vmem:[#allocation3 + $0x108] sm:$0xff]
    %v1117 = vld [vmem:[#allocation3 + $0x110] sm:$0xff]
    %v1118 = vld [vmem:[#allocation3 + $0x118] sm:$0xff]
    %vm1119 = vcmask 588800
    %v1121 = vsel %vm1119, %v1082, 0
    %1123 = vmatprep.subr.mxu0 0.0
    %1124 = vmatpush1.msra.mxu0 0.0
    %1125 = vmatprep.subr.mxu0 0.0
    %1126 = vmatpush1.msra.mxu0 0.0
    %1127 = vmatprep.subr.mxu0 0.0
    %1128 = vmatpush1.msra.mxu0 0.0
    %1129 = vmatprep.subr.mxu0 0.0
    %1130 = vmatpush1.msra.mxu0 0.0
    %1131 = vmatprep.subr.mxu0 0.0
    %1132 = vmatpush1.msra.mxu0 0.0
    %1133 = vmatprep.subr.mxu0 0.0
    %1134 = vmatpush1.msra.mxu0 0.0
    %1135 = vmatprep.subr.mxu0 0.0
    %1136 = vmatpush1.msra.mxu0 0.0
    %1137 = vmatprep.subr.mxu0 %v1116
    %1138 = vmatpush1.msra.mxu0 %v1115
    %1139 = vmatprep.subr.mxu0 %v1112
    %1140 = vmatpush1.msra.mxu0 %v1111
    %1141 = vmatprep.subr.mxu0 %v1108
    %1142 = vmatpush1.msra.mxu0 %v1107
    %1143 = vmatprep.subr.mxu0 %v1104
    %1144 = vmatpush1.msra.mxu0 %v1103
    %1145 = vmatprep.subr.mxu0 %v1100
    %1146 = vmatpush1.msra.mxu0 %v1099
    %1147 = vmatprep.subr.mxu0 %v1096
    %1148 = vmatpush1.msra.mxu0 %v1095
    %1149 = vmatprep.subr.mxu0 %v1092
    %1150 = vmatpush1.msra.mxu0 %v1091
    %1151 = vmatprep.subr.mxu0 %v1088
    %1152 = vmatpush1.msra.mxu0 %v1087
    %1153 = vmatprep.subr.mxu0 %v1084
    %1154 = vmatpush1.msra.mxu0 %v1083
    %1155 = vmatprep.subr.mxu0 0.0
    %1156 = vmatpush2.msra.mxu0 0.0
    %1157 = vmatprep.subr.mxu0 0.0
    %1158 = vmatpush2.msra.mxu0 0.0
    %1159 = vmatprep.subr.mxu0 0.0
    %1160 = vmatpush2.msra.mxu0 0.0
    %1161 = vmatprep.subr.mxu0 0.0
    %1162 = vmatpush2.msra.mxu0 0.0
    %1163 = vmatprep.subr.mxu0 0.0
    %1164 = vmatpush2.msra.mxu0 0.0
    %1165 = vmatprep.subr.mxu0 0.0
    %1166 = vmatpush2.msra.mxu0 0.0
    %1167 = vmatprep.subr.mxu0 0.0
    %1168 = vmatpush2.msra.mxu0 0.0
    %1169 = vmatprep.subr.mxu0 0.0
    %1170 = vmatpush2.msra.mxu0 0.0
    %1171 = vmatprep.subr.mxu0 0.0
    %1172 = vmatpush2.msra.mxu0 0.0
    %1173 = vmatprep.subr.mxu0 0.0
    %1174 = vmatpush2.msra.mxu0 0.0
    %1175 = vmatprep.subr.mxu0 0.0
    %1176 = vmatpush2.msra.mxu0 0.0
    %1177 = vmatprep.subr.mxu0 0.0
    %1178 = vmatpush2.msra.mxu0 0.0
    %1179 = vmatprep.subr.mxu0 0.0
    %1180 = vmatpush2.msra.mxu0 0.0
    %1181 = vmatprep.subr.mxu0 0.0
    %1182 = vmatpush2.msra.mxu0 0.0
    %1183 = vmatprep.subr.mxu0 0.0
    %1184 = vmatpush2.msra.mxu0 0.0
    %1185 = vmatprep.subr.mxu0 0.0
    %1186 = vmatpush2.msra.mxu0 0.0
    %1187 = vmatprep.mubr.f32.mxu0 0.0
    %1188 = vmatmul.mubr.f32.gmra.mxu0 %v1121
    %v1189 = vpop.f32.mrf.mxu0
    %v1190 = vadd.f32 0.0, %v1189
    %v1191 = vpop.f32.mrf.mxu0
    %v1192 = vadd.f32 0.0, %v1191
    %1193 = vdwg.mxu0
    %1194 = vmatprep.subr.mxu0 0.0
    %1195 = vmatpush1.msra.mxu0 0.0
    %1196 = vmatprep.subr.mxu0 0.0
    %1197 = vmatpush1.msra.mxu0 0.0
    %1198 = vmatprep.subr.mxu0 0.0
    %1199 = vmatpush1.msra.mxu0 0.0
    %1200 = vmatprep.subr.mxu0 0.0
    %1201 = vmatpush1.msra.mxu0 0.0
    %1202 = vmatprep.subr.mxu0 0.0
    %1203 = vmatpush1.msra.mxu0 0.0
    %1204 = vmatprep.subr.mxu0 0.0
    %1205 = vmatpush1.msra.mxu0 0.0
    %1206 = vmatprep.subr.mxu0 0.0
    %1207 = vmatpush1.msra.mxu0 0.0
    %1208 = vmatprep.subr.mxu0 %v1118
    %1209 = vmatpush1.msra.mxu0 %v1117
    %1210 = vmatprep.subr.mxu0 %v1114
    %1211 = vmatpush1.msra.mxu0 %v1113
    %1212 = vmatprep.subr.mxu0 %v1110
    %1213 = vmatpush1.msra.mxu0 %v1109
    %1214 = vmatprep.subr.mxu0 %v1106
    %1215 = vmatpush1.msra.mxu0 %v1105
    %1216 = vmatprep.subr.mxu0 %v1102
    %1217 = vmatpush1.msra.mxu0 %v1101
    %1218 = vmatprep.subr.mxu0 %v1098
    %1219 = vmatpush1.msra.mxu0 %v1097
    %1220 = vmatprep.subr.mxu0 %v1094
    %1221 = vmatpush1.msra.mxu0 %v1093
    %1222 = vmatprep.subr.mxu0 %v1090
    %1223 = vmatpush1.msra.mxu0 %v1089
    %1224 = vmatprep.subr.mxu0 %v1086
    %1225 = vmatpush1.msra.mxu0 %v1085
    %1226 = vmatprep.subr.mxu0 0.0
    %1227 = vmatpush2.msra.mxu0 0.0
    %1228 = vmatprep.subr.mxu0 0.0
    %1229 = vmatpush2.msra.mxu0 0.0
    %1230 = vmatprep.subr.mxu0 0.0
    %1231 = vmatpush2.msra.mxu0 0.0
    %1232 = vmatprep.subr.mxu0 0.0
    %1233 = vmatpush2.msra.mxu0 0.0
    %1234 = vmatprep.subr.mxu0 0.0
    %1235 = vmatpush2.msra.mxu0 0.0
    %1236 = vmatprep.subr.mxu0 0.0
    %1237 = vmatpush2.msra.mxu0 0.0
    %1238 = vmatprep.subr.mxu0 0.0
    %1239 = vmatpush2.msra.mxu0 0.0
    %1240 = vmatprep.subr.mxu0 0.0
    %1241 = vmatpush2.msra.mxu0 0.0
    %1242 = vmatprep.subr.mxu0 0.0
    %1243 = vmatpush2.msra.mxu0 0.0
    %1244 = vmatprep.subr.mxu0 0.0
    %1245 = vmatpush2.msra.mxu0 0.0
    %1246 = vmatprep.subr.mxu0 0.0
    %1247 = vmatpush2.msra.mxu0 0.0
    %1248 = vmatprep.subr.mxu0 0.0
    %1249 = vmatpush2.msra.mxu0 0.0
    %1250 = vmatprep.subr.mxu0 0.0
    %1251 = vmatpush2.msra.mxu0 0.0
    %1252 = vmatprep.subr.mxu0 0.0
    %1253 = vmatpush2.msra.mxu0 0.0
    %1254 = vmatprep.subr.mxu0 0.0
    %1255 = vmatpush2.msra.mxu0 0.0
    %1256 = vmatprep.subr.mxu0 0.0
    %1257 = vmatpush2.msra.mxu0 0.0
    %1258 = vmatprep.mubr.f32.mxu0 0.0
    %1259 = vmatmul.mubr.f32.gmra.mxu0 %v1121
    %v1260 = vpop.f32.mrf.mxu0
    %v1261 = vadd.f32 0.0, %v1260
    %v1262 = vpop.f32.mrf.mxu0
    %v1263 = vadd.f32 0.0, %v1262
    %1264 = vdwg.mxu0
    %v1265 = vadd.f32 %v1190, %v1192
    %v1266 = vadd.f32 %v1265, %v1261
    %v1267 = vadd.f32 %v1266, %v1263
    %1268 = vadd.xlane.f32.xlu0 %v1267
    %v1269 = vpop.xlane.xlu0 %1268
    %v1270 = vmul.f32 %v1269, %v673
    %v1271 = vmul.f32 %v1190, %v1190
    %v1272 = vmul.f32 %v1192, %v1192
    %v1273 = vmul.f32 %v1261, %v1261
    %v1274 = vmul.f32 %v1263, %v1263
    %v1275 = vadd.f32 %v1271, %v1272
    %v1276 = vadd.f32 %v1275, %v1273
    %v1277 = vadd.f32 %v1276, %v1274
    %1278 = vadd.xlane.f32.xlu0 %v1277
    %v1279 = vpop.xlane.xlu0 %1278
    %v1280 = vmul.f32 %v1279, %v673
    %v1281 = vmul.f32 %v1270, %v1270
    %v1282 = vsub.f32 %v1280, %v1281
    %v1283 = vld [vmem:[%s6] sm:$0xff]
    %v1284 = vadd.f32 %v1282, 1e-05
    %v1285 = vrsqrt.pop %v1284
    %v1286 = vmul.f32 %v1283, %v1285
    %v1287 = vld [vmem:[%s7] sm:$0xff]
    %v1288 = vmul.f32 %v1270, %v1286
    %v1289 = vsub.f32 %v1287, %v1288
    %1291 = vset.pattern.permute.xlu0 0
    %1292 = vperm.xlu0 %1291, %v1286
    %v1293 = vpop.permute.xlu0 %1292
    %v1295 = vmul.f32 %v1190, %v1293
    %v1296 = vmul.f32 %v1192, %v1293
    %v1297 = vmul.f32 %v1261, %v1293
    %v1298 = vmul.f32 %v1263, %v1293
    %1300 = vset.pattern.permute.xlu0 0
    %1301 = vperm.xlu0 %1300, %v1289
    %v1302 = vpop.permute.xlu0 %1301
    %v1304 = vadd.f32 %v1295, %v1302
    %v1305 = vadd.f32 %v1296, %v1302
    %v1306 = vadd.f32 %v1297, %v1302
    %v1307 = vadd.f32 %v1298, %v1302
    %v1308 = vmax.f32 %v1304, 0.0
    %v1309 = vmax.f32 %v1305, 0.0
    %v1310 = vmax.f32 %v1306, 0.0
    %v1311 = vmax.f32 %v1307, 0.0
    %1312 = vst [vmem:[#allocation7] sm:$0xff] %v1308
    %1313 = vst [vmem:[#allocation7 + $0x8] sm:$0xff] %v1309
    %1314 = vst [vmem:[#allocation7 + $0x10] sm:$0xff] %v1310
    %1315 = vst [vmem:[#allocation7 + $0x18] sm:$0xff] %v1311
    // Predicated region
    $region38: #{tpu_custom_call.1} parent=1 // pred_check
      _
    $region39: #{tpu_custom_call.1} parent=1 // pred_check_branch
      %1317 = sbr.rel (0) target = $region41
    $region40: #{tpu_custom_call.1} parent=1 // pred_region
      %s1319 = ssub.s32 512, 512
      %1320 = vsyncadd [#allocation6], %s1319
      %s1322 = sshll.u32 [#allocation7], 4
      %s1323 = int_to_ptr.vmem [resolvable:$true] %s1322
      %1325 = dma.vmem_to_hbm [thread:$0]  %s1323, 512, %s8, [#allocation6]
    $region41: #{tpu_custom_call.1} parent=1 // pred_fallthru
      _
    // Predicated region
    $region42: #{tpu_custom_call.1} parent=1 // pred_check
      _
    $region43: #{tpu_custom_call.1} parent=1 // pred_check_branch
      %1327 = sbr.rel (0) target = $region45
    $region44: #{tpu_custom_call.1} parent=1 // pred_region
      %1328 = dma.done [#allocation6], 512
    $region45: #{tpu_custom_call.1} parent=1 // pred_fallthru
      _
    %1329 = vsyncpa [#allocation5], 1
    %1330 = vsyncpa [#allocation6], 1

</llo_original>
